<compile_context>
chip_gen: v6e
topology: v6e:2x2x1
jax: 0.10.0
libtpu: 0.0.40
codegen_flags: <defaults>
</compile_context>

<pallas_src>
import jax
import jax.numpy as jnp
from jax import lax
from jax.experimental import pallas as pl
from jax.experimental.pallas import tpu as pltpu


def _detect_vmem_bytes():
    """Physical VMEM per TensorCore; conservative fallback (v7x = 64 MiB)."""
    try:
        return int(pltpu.get_tpu_info().vmem_capacity_bytes)
    except Exception:
        return 64 << 20


def _num_tensorcores():
    """TensorCores per device: v7x exposes 2 (megacore-style); v5e/v6e have 1."""
    try:
        dev = jax.devices()[0]
        if str(getattr(dev, "platform", "")).lower() != "tpu":
            return 1
        kind = str(getattr(dev, "device_kind", "")).lower()
        return 2 if "v7" in kind else 1
    except Exception:
        return 1


def _pick_tk(ksplit, te, w_elem_bytes, budget_bytes):
    """Largest divisor of ksplit whose (te, tk) weight tile fits in budget_bytes,
    preferring tk that is a multiple of 128 (lane-aligned BlockSpec)."""
    max_tk = max(budget_bytes // (te * w_elem_bytes), 1)
    best, best_aligned = 1, 0
    d = 1
    while d * d <= ksplit:
        if ksplit % d == 0:
            for cand in (d, ksplit // d):
                if cand <= max_tk:
                    best = max(best, cand)
                    if cand % 128 == 0:
                        best_aligned = max(best_aligned, cand)
        d += 1
    tk = best_aligned if best_aligned else best
    # (8,128) rule: last block dim must be a multiple of 128 or the full dim.
    assert tk % 128 == 0 or tk == ksplit, (
        f"no valid K tile for ksplit={ksplit}, te={te} under budget {budget_bytes}")
    return tk


def linear_kernel(x_ref, w_ref, o_ref):
    """One (core-split, E-tile, K-tile) grid step of out = W @ x.T, accumulating
    over the K axis.

    The output block is the accumulator: its BlockSpec returns the same block
    index for every K step and its dtype is f32.  The weight is the streaming
    (LHS) MXU operand; the tiny activation [B, tk] is stationary.
    """
    @pl.when(pl.program_id(2) == 0)
    def _():
        o_ref[...] = jnp.zeros_like(o_ref)

    # w [te, tk] (native torch [E, K] layout) contracted with x [B, tk] on the
    # K dimension -> [te, B].  bf16 operands + preferred f32 = single MXU pass.
    o_ref[...] += lax.dot_general(
        w_ref[...],
        x_ref[...],
        dimension_numbers=(((1,), (1,)), ((), ())),
        preferred_element_type=jnp.float32,
        precision=lax.Precision.DEFAULT,
    )


def image_embeddings_forward(x, weight, *, te=None, tk=None,
                             compute_dtype=jnp.bfloat16, num_cores=None):
    """x: [B, K], weight: [E, K] (native torch nn.Linear layout, no bias).

    Returns [1, B*E] float32, matching `emb(data).flatten().unsqueeze(0)`.
    """
    B, K = x.shape
    E, K2 = weight.shape
    assert K == K2, "in_features mismatch"

    # Cast to the streaming dtype (ideally the weight is already converted once
    # at parameter-load time; these are no-ops then / tiny for x).
    if x.dtype != compute_dtype:
        x = x.astype(compute_dtype)
    if weight.dtype != compute_dtype:
        weight = weight.astype(compute_dtype)

    # E tile: lane-dense 128 when possible, otherwise the full (small) E.
    if te is None:
        te = 128 if (E % 128 == 0) else E
    assert E % te == 0 and (te % 128 == 0 or te == E), "bad E tile"
    n_e = E // te

    # Split K across TensorCores on multi-core parts (v7x); each core produces
    # a partial [E, B] sum combined in the wrapper.
    nsplit = _num_tensorcores() if num_cores is None else int(num_cores)
    if nsplit < 1 or K % nsplit != 0:
        nsplit = 1
    ksplit = K // nsplit

    c_bytes = jnp.dtype(compute_dtype).itemsize
    vmem_cap = _detect_vmem_bytes()

    if tk is None:
        # Weight tile should use at most ~1/8 of physical VMEM (x2 for double
        # buffering still leaves ample headroom, incl. under v7x's 64 MiB).
        tk = _pick_tk(ksplit, te, c_bytes, budget_bytes=max(vmem_cap // 8, 1 << 20))
    assert ksplit % tk == 0, "tk must divide the per-core K range"
    nk = ksplit // tk

    # Scoped VMEM: double-buffered weight + x tiles, resident f32 output block,
    # plus headroom for compiler scratch; capped well under physical VMEM.
    needed = 2 * te * tk * c_bytes + 2 * B * tk * c_bytes + 2 * te * B * 4
    vmem_limit = int(min(vmem_cap * 3 // 4, max(needed + (16 << 20), 32 << 20)))

    grid = (nsplit, n_e, nk)

    out = pl.pallas_call(
        linear_kernel,
        out_shape=jax.ShapeDtypeStruct((nsplit * E, B), jnp.float32),
        grid_spec=pltpu.PrefetchScalarGridSpec(
            num_scalar_prefetch=0,
            grid=grid,
            in_specs=[
                # activations [B, K]: one lane-aligned K tile per step
                pl.BlockSpec((B, tk), lambda c, j, k: (0, c * nk + k)),
                # weight in native torch [E, K] layout, streamed tile by tile
                pl.BlockSpec((te, tk), lambda c, j, k: (j, c * nk + k)),
            ],
            # per-core partial output slab; same block across the K axis
            out_specs=pl.BlockSpec((te, B), lambda c, j, k: (c * n_e + j, 0)),
        ),
        compiler_params=pltpu.CompilerParams(
            dimension_semantics=("parallel", "parallel", "arbitrary"),
            vmem_limit_bytes=vmem_limit,
        ),
    )(x, weight)

    # Combine per-core partial sums, then transpose to [B, E] before the
    # flatten so the batch-major order of torch's `.flatten()` is preserved.
    out = out.reshape(nsplit, E, B)
    out = out[0] if nsplit == 1 else out.sum(axis=0)
    return out.T.reshape(1, -1)


if __name__ == "__main__":
    # Small shapes consistent with the module's forward (Linear, no bias).
    # The real module uses in_features=160000; shrunk here for a fast runnable
    # example -- the K-tiled kernel handles the full 160000 unchanged.
    B = 2
    IN_FEATURES = 2048
    EMBEDDING_SIZE = 128

    key = jax.random.PRNGKey(0)
    kx, kw = jax.random.split(key)

    # Deterministic synthetic parameters (torch nn.Linear weight shape [E, K]).
    weight_f32 = jax.random.normal(
        kw, (EMBEDDING_SIZE, IN_FEATURES), dtype=jnp.float32
    ) * (1.0 / jnp.sqrt(IN_FEATURES))
    # Parameter-load-time conversion: stream the weight as bf16 (halves HBM
    # traffic for the real 82 MB weight; MXU multiplies in bf16 anyway).
    weight = weight_f32.astype(jnp.bfloat16)

    # Deterministic synthetic input "data": [B, in_features].
    x = jax.random.normal(kx, (B, IN_FEATURES), dtype=jnp.float32)

    out = image_embeddings_forward(x, weight)
    out = jax.block_until_ready(out)

    # Reference with matching bf16-multiply / f32-accumulate semantics:
    # (x @ W.T).flatten()[None, :]
    ref = jnp.dot(
        x.astype(jnp.bfloat16), weight.T, preferred_element_type=jnp.float32
    ).reshape(1, -1)

    assert out.shape == (1, B * EMBEDDING_SIZE), out.shape
    assert out.dtype == jnp.float32
    assert jnp.allclose(out, ref, rtol=1e-2, atol=1e-2), \
        float(jnp.max(jnp.abs(out - ref)))

    # TODO(synk): torch's `.detach().numpy()` host conversion has no in-kernel
    # equivalent; the JAX array result is returned instead.
    print("KERNEL_OK")
</pallas_src>

<mosaic_0001>
module attributes {stable_mosaic.version = 11 : i64} {
  func.func @linear_kernel(%arg0: i32, %arg1: i32, %arg2: i32, %arg3: memref<2x2048xbf16, #tpu.memory_space<vmem>>, %arg4: memref<128x2048xbf16, #tpu.memory_space<vmem>>, %arg5: memref<128x2xf32, #tpu.memory_space<vmem>>) attributes {dimension_semantics = [#tpu.dimension_semantics<parallel>, #tpu.dimension_semantics<parallel>, #tpu.dimension_semantics<arbitrary>], iteration_bounds = array<i64: 1, 1, 1>, scalar_prefetch = 0 : i64, scratch_operands = 0 : i64, tpu.core_type = #tpu.core_type<tc>, window_params = [{transform_indices = @transform_0, window_bounds = array<i64: 2, 2048>}, {transform_indices = @transform_1, window_bounds = array<i64: 128, 2048>}, {transform_indices = @transform_2, window_bounds = array<i64: 128, 2>}]} {
    %c0_i32 = arith.constant 0 : i32
    %0 = arith.cmpi eq, %arg2, %c0_i32 : i32
    %1 = arith.extui %0 : i1 to i32
    %c0_i32_0 = arith.constant 0 : i32
    %2 = arith.cmpi ne, %1, %c0_i32_0 : i32
    scf.if %2 {
      %cst_8 = arith.constant 0.000000e+00 : f32
      %9 = vector.broadcast %cst_8 : f32 to vector<128x2xf32>
      %c0_9 = arith.constant 0 : index
      %c0_10 = arith.constant 0 : index
      %10 = vector.load %arg5[%c0_9, %c0_10] : memref<128x2xf32, #tpu.memory_space<vmem>>, vector<128x2xf32>
      tpu.vector_store %arg5[%c0_9, %c0_10], %9 {strides = array<i32>} : memref<128x2xf32, #tpu.memory_space<vmem>>, vector<128x2xf32>,
    } else {
    }
    %c0 = arith.constant 0 : index
    %c0_1 = arith.constant 0 : index
    %3 = vector.load %arg5[%c0, %c0_1] : memref<128x2xf32, #tpu.memory_space<vmem>>, vector<128x2xf32>
    %c0_2 = arith.constant 0 : index
    %c0_3 = arith.constant 0 : index
    %4 = vector.load %arg4[%c0_2, %c0_3] : memref<128x2048xbf16, #tpu.memory_space<vmem>>, vector<128x2048xbf16>
    %c0_4 = arith.constant 0 : index
    %c0_5 = arith.constant 0 : index
    %5 = vector.load %arg3[%c0_4, %c0_5] : memref<2x2048xbf16, #tpu.memory_space<vmem>>, vector<2x2048xbf16>
    %cst = arith.constant dense<0.000000e+00> : vector<128x2xf32>
    %6 = tpu.matmul %4, %5, %cst {dimension_numbers = #tpu.dot_dimension_numbers<[1], [1], [0], [0], [0, 0, 1, 0], [], []>} : vector<128x2048xbf16>, vector<2x2048xbf16>, vector<128x2xf32> -> vector<128x2xf32>
    %7 = arith.addf %3, %6 : vector<128x2xf32>
    %c0_6 = arith.constant 0 : index
    %c0_7 = arith.constant 0 : index
    %8 = vector.load %arg5[%c0_6, %c0_7] : memref<128x2xf32, #tpu.memory_space<vmem>>, vector<128x2xf32>
    tpu.vector_store %arg5[%c0_6, %c0_7], %7 {strides = array<i32>} : memref<128x2xf32, #tpu.memory_space<vmem>>, vector<128x2xf32>,
    return
  }
  func.func @transform_0(%arg0: i32, %arg1: i32, %arg2: i32) -> (i32, i32) {
    %c1_i32 = arith.constant 1 : i32
    %0 = arith.muli %arg0, %c1_i32 : i32
    %1 = arith.addi %0, %arg2 : i32
    %c0_i32 = arith.constant 0 : i32
    %c0_i32_0 = arith.constant 0 : i32
    return %c0_i32, %1 : i32, i32
  }
  func.func @transform_1(%arg0: i32, %arg1: i32, %arg2: i32) -> (i32, i32) {
    %c1_i32 = arith.constant 1 : i32
    %0 = arith.muli %arg0, %c1_i32 : i32
    %1 = arith.addi %0, %arg2 : i32
    %c0_i32 = arith.constant 0 : i32
    return %arg1, %1 : i32, i32
  }
  func.func @transform_2(%arg0: i32, %arg1: i32, %arg2: i32) -> (i32, i32) {
    %c1_i32 = arith.constant 1 : i32
    %0 = arith.muli %arg0, %c1_i32 : i32
    %1 = arith.addi %0, %arg1 : i32
    %c0_i32 = arith.constant 0 : i32
    %c0_i32_0 = arith.constant 0 : i32
    return %1, %c0_i32 : i32, i32
  }
}

</mosaic_0001>

<llo_original>
// kernel: tpu_custom_call.1
$region0: #{tpu_custom_call.1}
  #allocation0 [shape = 'u32[]', space=smem, size = 0x4, offset = 0x4, fixed_abs, tag = 'smem constant byte address 0x4 - core index']
  #allocation1 [shape = 'u32[144,128]{1,0:T(1,128)}', space=vmem, size = 0x12000, scoped, tag = 'internal scratch']
  %s0 = inlined_call_operand.hbm [shape: bf16[2,2048], index: 0, kind: input, shape index: {}]
  %s1 = inlined_call_operand.hbm [shape: bf16[128,2048], index: 1, kind: input, shape index: {}]
  %s2 = inlined_call_operand.vmem [shape: f32[128,2], index: 2, kind: output, shape index: {}]
  %s3 = sld [smem:[#allocation0]]
  $region30: #{tpu_custom_call.1} parent=0
    _
  %s5 = ssub.s32 1, %s3
  %s6 = scalar_select 0, %s5, %s3
  $region1: #{tpu_custom_call.1} parent=0
    #allocation2 [shape = 'u8[8192]{0}', space=vmem, size = 0x2000, scoped, tag = 'input window, operand 0, single buffered']
    #allocation3 [shape = 's32[1]{0}', space=sflag, size = 0x4, scoped, tag = 'scoped memory for tpu_custom_call.1']
    #allocation4 [shape = 'u8[524288]{0}', space=vmem, size = 0x80000, scoped, tag = 'input window, operand 1, single buffered']
    #allocation5 [shape = 's32[1]{0}', space=sflag, size = 0x4, scoped, tag = 'scoped memory for tpu_custom_call.1']
    %7 = vsyncpa [#allocation3], 0
    %8 = vsyncpa [#allocation5], 0
    // Predicated region
    $region2: #{tpu_custom_call.1} parent=1 // pred_check
      _
    $region3: #{tpu_custom_call.1} parent=1 // pred_check_branch
      %10 = sbr.rel (0) target = $region5
    $region4: #{tpu_custom_call.1} parent=1 // pred_region
      %s11 = sadd.s32 0, 0
      %s12 = smul.u32 16, %s11
      %s14 = ssub.s32 256, 256
      %15 = vsyncadd [#allocation3], %s14
      %s16 = smul.addr %s12, 16
      %s17 = scalar_lea.hbm %s0, %s16
      %s19 = sshll.u32 [#allocation2], 4
      %s20 = int_to_ptr.vmem [resolvable:$true] %s19
      %22 = dma.hbm_to_vmem [thread:$0]  %s17, 256, %s20, [#allocation3]
    $region5: #{tpu_custom_call.1} parent=1 // pred_fallthru
      _
    // Predicated region
    $region6: #{tpu_custom_call.1} parent=1 // pred_check
      _
    $region7: #{tpu_custom_call.1} parent=1 // pred_check_branch
      %24 = sbr.rel (0) target = $region9
    $region8: #{tpu_custom_call.1} parent=1 // pred_region
      %s25 = sadd.s32 0, 0
      %s26 = smul.u32 16, %s25
      %s28 = ssub.s32 16384, 16384
      %29 = vsyncadd [#allocation5], %s28
      %s30 = smul.addr %s26, 64
      %s31 = scalar_lea.hbm %s1, %s30
      %s32 = sshll.u32 [#allocation4], 4
      %s33 = int_to_ptr.vmem [resolvable:$true] %s32
      %38 = dma.hbm_to_vmem [thread:$0]  %s31, 16384, %s33, [#allocation5], 1024, 1024, 64
    $region9: #{tpu_custom_call.1} parent=1 // pred_fallthru
      _
    // Predicated region
    $region10: #{tpu_custom_call.1} parent=1 // pred_check
      _
    $region11: #{tpu_custom_call.1} parent=1 // pred_check_branch
      %40 = sbr.rel (0) target = $region13
    $region12: #{tpu_custom_call.1} parent=1 // pred_region
      %41 = dma.done [#allocation3], 256
    $region13: #{tpu_custom_call.1} parent=1 // pred_fallthru
      _
    // Predicated region
    $region14: #{tpu_custom_call.1} parent=1 // pred_check
      _
    $region15: #{tpu_custom_call.1} parent=1 // pred_check_branch
      %43 = sbr.rel (0) target = $region17
    $region16: #{tpu_custom_call.1} parent=1 // pred_region
      %44 = dma.done [#allocation5], 16384
    $region17: #{tpu_custom_call.1} parent=1 // pred_fallthru
      _
    %s45 = sadd.s32 0, 0
    %s46 = smul.u32 16, %s45
    %p47 = scmp.lt.s32.totalorder %s46, 15
    %s48 = scalar_select %p47, %s46, 15
    %s49 = smul.addr %s48, 8
    %s50 = scalar_lea.vmem %s2, %s49
    %s51 = sadd.s32 0, 0
    %s52 = smul.u32 16, %s51
    %s53 = sadd.s32 0, 0
    %s54 = smul.u32 16, %s53
    %s55 = sadd.s32 0, 0
    %s56 = smul.u32 16, %s55
    %p57 = scmp.lt.s32.totalorder %s56, 15
    %s58 = scalar_select %p57, %s56, 15
    %s59 = smul.addr %s58, 8
    %s60 = scalar_lea.vmem %s2, %s59
    %s61 = sadd.s32 0, 0
    %s62 = smul.u32 16, %s61
    %p64 = scmp.eq.s32.totalorder 0, 0
    // Predicated region
    $region18: #{tpu_custom_call.1} parent=1 // pred_check
      %p65 = pneg %p64
    $region19: #{tpu_custom_call.1} parent=1 // pred_check_branch
      %67 = sbr.rel (%p65) target = $region21
    $region20: #{tpu_custom_call.1} parent=1 // pred_region
      %vm68 = vcmask 15360
      %69 = vst.msk [vmem:[%s60] sm:$0xff] %vm68, 0.0
      %70 = vst.msk [vmem:[%s60 + $0x8] sm:$0xff] %vm68, 0.0
      %71 = vst.msk [vmem:[%s60 + $0x10] sm:$0xff] %vm68, 0.0
      %72 = vst.msk [vmem:[%s60 + $0x18] sm:$0xff] %vm68, 0.0
      %73 = vst.msk [vmem:[%s60 + $0x20] sm:$0xff] %vm68, 0.0
      %74 = vst.msk [vmem:[%s60 + $0x28] sm:$0xff] %vm68, 0.0
      %75 = vst.msk [vmem:[%s60 + $0x30] sm:$0xff] %vm68, 0.0
      %76 = vst.msk [vmem:[%s60 + $0x38] sm:$0xff] %vm68, 0.0
      %77 = vst.msk [vmem:[%s60 + $0x40] sm:$0xff] %vm68, 0.0
      %78 = vst.msk [vmem:[%s60 + $0x48] sm:$0xff] %vm68, 0.0
      %79 = vst.msk [vmem:[%s60 + $0x50] sm:$0xff] %vm68, 0.0
      %80 = vst.msk [vmem:[%s60 + $0x58] sm:$0xff] %vm68, 0.0
      %81 = vst.msk [vmem:[%s60 + $0x60] sm:$0xff] %vm68, 0.0
      %82 = vst.msk [vmem:[%s60 + $0x68] sm:$0xff] %vm68, 0.0
      %83 = vst.msk [vmem:[%s60 + $0x70] sm:$0xff] %vm68, 0.0
      %84 = vst.msk [vmem:[%s60 + $0x78] sm:$0xff] %vm68, 0.0
    $region21: #{tpu_custom_call.1} parent=1 // pred_fallthru
      _
    %v85 = vld [vmem:[%s60] sm:$0xff]
    %v86 = vld [vmem:[%s60 + $0x8] sm:$0xff]
    %v87 = vld [vmem:[%s60 + $0x10] sm:$0xff]
    %v88 = vld [vmem:[%s60 + $0x18] sm:$0xff]
    %v89 = vld [vmem:[%s60 + $0x20] sm:$0xff]
    %v90 = vld [vmem:[%s60 + $0x28] sm:$0xff]
    %v91 = vld [vmem:[%s60 + $0x30] sm:$0xff]
    %v92 = vld [vmem:[%s60 + $0x38] sm:$0xff]
    %v93 = vld [vmem:[%s60 + $0x40] sm:$0xff]
    %v94 = vld [vmem:[%s60 + $0x48] sm:$0xff]
    %v95 = vld [vmem:[%s60 + $0x50] sm:$0xff]
    %v96 = vld [vmem:[%s60 + $0x58] sm:$0xff]
    %v97 = vld [vmem:[%s60 + $0x60] sm:$0xff]
    %v98 = vld [vmem:[%s60 + $0x68] sm:$0xff]
    %v99 = vld [vmem:[%s60 + $0x70] sm:$0xff]
    %v100 = vld [vmem:[%s60 + $0x78] sm:$0xff]
    %v101 = vld [vmem:[#allocation4] sm:$0xff]
    %v102 = vld [vmem:[#allocation4 + $0x8] sm:$0xff]
    %v103 = vld [vmem:[#allocation4 + $0x10] sm:$0xff]
    %v104 = vld [vmem:[#allocation4 + $0x18] sm:$0xff]
    %v105 = vld [vmem:[#allocation4 + $0x20] sm:$0xff]
    %v106 = vld [vmem:[#allocation4 + $0x28] sm:$0xff]
    %v107 = vld [vmem:[#allocation4 + $0x30] sm:$0xff]
    %v108 = vld [vmem:[#allocation4 + $0x38] sm:$0xff]
    %v109 = vld [vmem:[#allocation4 + $0x40] sm:$0xff]
    %v110 = vld [vmem:[#allocation4 + $0x48] sm:$0xff]
    %v111 = vld [vmem:[#allocation4 + $0x50] sm:$0xff]
    %v112 = vld [vmem:[#allocation4 + $0x58] sm:$0xff]
    %v113 = vld [vmem:[#allocation4 + $0x60] sm:$0xff]
    %v114 = vld [vmem:[#allocation4 + $0x68] sm:$0xff]
    %v115 = vld [vmem:[#allocation4 + $0x70] sm:$0xff]
    %v116 = vld [vmem:[#allocation4 + $0x78] sm:$0xff]
    %v117 = vld [vmem:[#allocation4 + $0x80] sm:$0xff]
    %v118 = vld [vmem:[#allocation4 + $0x88] sm:$0xff]
    %v119 = vld [vmem:[#allocation4 + $0x90] sm:$0xff]
    %v120 = vld [vmem:[#allocation4 + $0x98] sm:$0xff]
    %v121 = vld [vmem:[#allocation4 + $0xa0] sm:$0xff]
    %v122 = vld [vmem:[#allocation4 + $0xa8] sm:$0xff]
    %v123 = vld [vmem:[#allocation4 + $0xb0] sm:$0xff]
    %v124 = vld [vmem:[#allocation4 + $0xb8] sm:$0xff]
    %v125 = vld [vmem:[#allocation4 + $0xc0] sm:$0xff]
    %v126 = vld [vmem:[#allocation4 + $0xc8] sm:$0xff]
    %v127 = vld [vmem:[#allocation4 + $0xd0] sm:$0xff]
    %v128 = vld [vmem:[#allocation4 + $0xd8] sm:$0xff]
    %v129 = vld [vmem:[#allocation4 + $0xe0] sm:$0xff]
    %v130 = vld [vmem:[#allocation4 + $0xe8] sm:$0xff]
    %v131 = vld [vmem:[#allocation4 + $0xf0] sm:$0xff]
    %v132 = vld [vmem:[#allocation4 + $0xf8] sm:$0xff]
    %v133 = vld [vmem:[#allocation4 + $0x100] sm:$0xff]
    %v134 = vld [vmem:[#allocation4 + $0x108] sm:$0xff]
    %v135 = vld [vmem:[#allocation4 + $0x110] sm:$0xff]
    %v136 = vld [vmem:[#allocation4 + $0x118] sm:$0xff]
    %v137 = vld [vmem:[#allocation4 + $0x120] sm:$0xff]
    %v138 = vld [vmem:[#allocation4 + $0x128] sm:$0xff]
    %v139 = vld [vmem:[#allocation4 + $0x130] sm:$0xff]
    %v140 = vld [vmem:[#allocation4 + $0x138] sm:$0xff]
    %v141 = vld [vmem:[#allocation4 + $0x140] sm:$0xff]
    %v142 = vld [vmem:[#allocation4 + $0x148] sm:$0xff]
    %v143 = vld [vmem:[#allocation4 + $0x150] sm:$0xff]
    %v144 = vld [vmem:[#allocation4 + $0x158] sm:$0xff]
    %v145 = vld [vmem:[#allocation4 + $0x160] sm:$0xff]
    %v146 = vld [vmem:[#allocation4 + $0x168] sm:$0xff]
    %v147 = vld [vmem:[#allocation4 + $0x170] sm:$0xff]
    %v148 = vld [vmem:[#allocation4 + $0x178] sm:$0xff]
    %v149 = vld [vmem:[#allocation4 + $0x180] sm:$0xff]
    %v150 = vld [vmem:[#allocation4 + $0x188] sm:$0xff]
    %v151 = vld [vmem:[#allocation4 + $0x190] sm:$0xff]
    %v152 = vld [vmem:[#allocation4 + $0x198] sm:$0xff]
    %v153 = vld [vmem:[#allocation4 + $0x1a0] sm:$0xff]
    %v154 = vld [vmem:[#allocation4 + $0x1a8] sm:$0xff]
    %v155 = vld [vmem:[#allocation4 + $0x1b0] sm:$0xff]
    %v156 = vld [vmem:[#allocation4 + $0x1b8] sm:$0xff]
    %v157 = vld [vmem:[#allocation4 + $0x1c0] sm:$0xff]
    %v158 = vld [vmem:[#allocation4 + $0x1c8] sm:$0xff]
    %v159 = vld [vmem:[#allocation4 + $0x1d0] sm:$0xff]
    %v160 = vld [vmem:[#allocation4 + $0x1d8] sm:$0xff]
    %v161 = vld [vmem:[#allocation4 + $0x1e0] sm:$0xff]
    %v162 = vld [vmem:[#allocation4 + $0x1e8] sm:$0xff]
    %v163 = vld [vmem:[#allocation4 + $0x1f0] sm:$0xff]
    %v164 = vld [vmem:[#allocation4 + $0x1f8] sm:$0xff]
    %v165 = vld [vmem:[#allocation4 + $0x200] sm:$0xff]
    %v166 = vld [vmem:[#allocation4 + $0x208] sm:$0xff]
    %v167 = vld [vmem:[#allocation4 + $0x210] sm:$0xff]
    %v168 = vld [vmem:[#allocation4 + $0x218] sm:$0xff]
    %v169 = vld [vmem:[#allocation4 + $0x220] sm:$0xff]
    %v170 = vld [vmem:[#allocation4 + $0x228] sm:$0xff]
    %v171 = vld [vmem:[#allocation4 + $0x230] sm:$0xff]
    %v172 = vld [vmem:[#allocation4 + $0x238] sm:$0xff]
    %v173 = vld [vmem:[#allocation4 + $0x240] sm:$0xff]
    %v174 = vld [vmem:[#allocation4 + $0x248] sm:$0xff]
    %v175 = vld [vmem:[#allocation4 + $0x250] sm:$0xff]
    %v176 = vld [vmem:[#allocation4 + $0x258] sm:$0xff]
    %v177 = vld [vmem:[#allocation4 + $0x260] sm:$0xff]
    %v178 = vld [vmem:[#allocation4 + $0x268] sm:$0xff]
    %v179 = vld [vmem:[#allocation4 + $0x270] sm:$0xff]
    %v180 = vld [vmem:[#allocation4 + $0x278] sm:$0xff]
    %v181 = vld [vmem:[#allocation4 + $0x280] sm:$0xff]
    %v182 = vld [vmem:[#allocation4 + $0x288] sm:$0xff]
    %v183 = vld [vmem:[#allocation4 + $0x290] sm:$0xff]
    %v184 = vld [vmem:[#allocation4 + $0x298] sm:$0xff]
    %v185 = vld [vmem:[#allocation4 + $0x2a0] sm:$0xff]
    %v186 = vld [vmem:[#allocation4 + $0x2a8] sm:$0xff]
    %v187 = vld [vmem:[#allocation4 + $0x2b0] sm:$0xff]
    %v188 = vld [vmem:[#allocation4 + $0x2b8] sm:$0xff]
    %v189 = vld [vmem:[#allocation4 + $0x2c0] sm:$0xff]
    %v190 = vld [vmem:[#allocation4 + $0x2c8] sm:$0xff]
    %v191 = vld [vmem:[#allocation4 + $0x2d0] sm:$0xff]
    %v192 = vld [vmem:[#allocation4 + $0x2d8] sm:$0xff]
    %v193 = vld [vmem:[#allocation4 + $0x2e0] sm:$0xff]
    %v194 = vld [vmem:[#allocation4 + $0x2e8] sm:$0xff]
    %v195 = vld [vmem:[#allocation4 + $0x2f0] sm:$0xff]
    %v196 = vld [vmem:[#allocation4 + $0x2f8] sm:$0xff]
    %v197 = vld [vmem:[#allocation4 + $0x300] sm:$0xff]
    %v198 = vld [vmem:[#allocation4 + $0x308] sm:$0xff]
    %v199 = vld [vmem:[#allocation4 + $0x310] sm:$0xff]
    %v200 = vld [vmem:[#allocation4 + $0x318] sm:$0xff]
    %v201 = vld [vmem:[#allocation4 + $0x320] sm:$0xff]
    %v202 = vld [vmem:[#allocation4 + $0x328] sm:$0xff]
    %v203 = vld [vmem:[#allocation4 + $0x330] sm:$0xff]
    %v204 = vld [vmem:[#allocation4 + $0x338] sm:$0xff]
    %v205 = vld [vmem:[#allocation4 + $0x340] sm:$0xff]
    %v206 = vld [vmem:[#allocation4 + $0x348] sm:$0xff]
    %v207 = vld [vmem:[#allocation4 + $0x350] sm:$0xff]
    %v208 = vld [vmem:[#allocation4 + $0x358] sm:$0xff]
    %v209 = vld [vmem:[#allocation4 + $0x360] sm:$0xff]
    %v210 = vld [vmem:[#allocation4 + $0x368] sm:$0xff]
    %v211 = vld [vmem:[#allocation4 + $0x370] sm:$0xff]
    %v212 = vld [vmem:[#allocation4 + $0x378] sm:$0xff]
    %v213 = vld [vmem:[#allocation4 + $0x380] sm:$0xff]
    %v214 = vld [vmem:[#allocation4 + $0x388] sm:$0xff]
    %v215 = vld [vmem:[#allocation4 + $0x390] sm:$0xff]
    %v216 = vld [vmem:[#allocation4 + $0x398] sm:$0xff]
    %v217 = vld [vmem:[#allocation4 + $0x3a0] sm:$0xff]
    %v218 = vld [vmem:[#allocation4 + $0x3a8] sm:$0xff]
    %v219 = vld [vmem:[#allocation4 + $0x3b0] sm:$0xff]
    %v220 = vld [vmem:[#allocation4 + $0x3b8] sm:$0xff]
    %v221 = vld [vmem:[#allocation4 + $0x3c0] sm:$0xff]
    %v222 = vld [vmem:[#allocation4 + $0x3c8] sm:$0xff]
    %v223 = vld [vmem:[#allocation4 + $0x3d0] sm:$0xff]
    %v224 = vld [vmem:[#allocation4 + $0x3d8] sm:$0xff]
    %v225 = vld [vmem:[#allocation4 + $0x3e0] sm:$0xff]
    %v226 = vld [vmem:[#allocation4 + $0x3e8] sm:$0xff]
    %v227 = vld [vmem:[#allocation4 + $0x3f0] sm:$0xff]
    %v228 = vld [vmem:[#allocation4 + $0x3f8] sm:$0xff]
    %v229 = vld [vmem:[#allocation2] sm:$0xff]
    %v230 = vld [vmem:[#allocation2 + $0x8] sm:$0xff]
    %v359 = vunpack.c.l.b16 %v101
    %v360 = vunpack.c.h.b16 %v101
    %v361 = vunpack.c.l.b16 %v102
    %v362 = vunpack.c.h.b16 %v102
    %v363 = vunpack.c.l.b16 %v103
    %v364 = vunpack.c.h.b16 %v103
    %v365 = vunpack.c.l.b16 %v104
    %v366 = vunpack.c.h.b16 %v104
    %v367 = vunpack.c.l.b16 %v105
    %v368 = vunpack.c.h.b16 %v105
    %v369 = vunpack.c.l.b16 %v106
    %v370 = vunpack.c.h.b16 %v106
    %v371 = vunpack.c.l.b16 %v107
    %v372 = vunpack.c.h.b16 %v107
    %v373 = vunpack.c.l.b16 %v108
    %v374 = vunpack.c.h.b16 %v108
    %v375 = vunpack.c.l.b16 %v109
    %v376 = vunpack.c.h.b16 %v109
    %v377 = vunpack.c.l.b16 %v110
    %v378 = vunpack.c.h.b16 %v110
    %v379 = vunpack.c.l.b16 %v111
    %v380 = vunpack.c.h.b16 %v111
    %v381 = vunpack.c.l.b16 %v112
    %v382 = vunpack.c.h.b16 %v112
    %v383 = vunpack.c.l.b16 %v113
    %v384 = vunpack.c.h.b16 %v113
    %v385 = vunpack.c.l.b16 %v114
    %v386 = vunpack.c.h.b16 %v114
    %v387 = vunpack.c.l.b16 %v115
    %v388 = vunpack.c.h.b16 %v115
    %v389 = vunpack.c.l.b16 %v116
    %v390 = vunpack.c.h.b16 %v116
    %v391 = vunpack.c.l.b16 %v117
    %v392 = vunpack.c.h.b16 %v117
    %v393 = vunpack.c.l.b16 %v118
    %v394 = vunpack.c.h.b16 %v118
    %v395 = vunpack.c.l.b16 %v119
    %v396 = vunpack.c.h.b16 %v119
    %v397 = vunpack.c.l.b16 %v120
    %v398 = vunpack.c.h.b16 %v120
    %v399 = vunpack.c.l.b16 %v121
    %v400 = vunpack.c.h.b16 %v121
    %v401 = vunpack.c.l.b16 %v122
    %v402 = vunpack.c.h.b16 %v122
    %v403 = vunpack.c.l.b16 %v123
    %v404 = vunpack.c.h.b16 %v123
    %v405 = vunpack.c.l.b16 %v124
    %v406 = vunpack.c.h.b16 %v124
    %v407 = vunpack.c.l.b16 %v125
    %v408 = vunpack.c.h.b16 %v125
    %v409 = vunpack.c.l.b16 %v126
    %v410 = vunpack.c.h.b16 %v126
    %v411 = vunpack.c.l.b16 %v127
    %v412 = vunpack.c.h.b16 %v127
    %v413 = vunpack.c.l.b16 %v128
    %v414 = vunpack.c.h.b16 %v128
    %v415 = vunpack.c.l.b16 %v129
    %v416 = vunpack.c.h.b16 %v129
    %v417 = vunpack.c.l.b16 %v130
    %v418 = vunpack.c.h.b16 %v130
    %v419 = vunpack.c.l.b16 %v131
    %v420 = vunpack.c.h.b16 %v131
    %v421 = vunpack.c.l.b16 %v132
    %v422 = vunpack.c.h.b16 %v132
    %v423 = vunpack.c.l.b16 %v133
    %v424 = vunpack.c.h.b16 %v133
    %v425 = vunpack.c.l.b16 %v134
    %v426 = vunpack.c.h.b16 %v134
    %v427 = vunpack.c.l.b16 %v135
    %v428 = vunpack.c.h.b16 %v135
    %v429 = vunpack.c.l.b16 %v136
    %v430 = vunpack.c.h.b16 %v136
    %v431 = vunpack.c.l.b16 %v137
    %v432 = vunpack.c.h.b16 %v137
    %v433 = vunpack.c.l.b16 %v138
    %v434 = vunpack.c.h.b16 %v138
    %v435 = vunpack.c.l.b16 %v139
    %v436 = vunpack.c.h.b16 %v139
    %v437 = vunpack.c.l.b16 %v140
    %v438 = vunpack.c.h.b16 %v140
    %v439 = vunpack.c.l.b16 %v141
    %v440 = vunpack.c.h.b16 %v141
    %v441 = vunpack.c.l.b16 %v142
    %v442 = vunpack.c.h.b16 %v142
    %v443 = vunpack.c.l.b16 %v143
    %v444 = vunpack.c.h.b16 %v143
    %v445 = vunpack.c.l.b16 %v144
    %v446 = vunpack.c.h.b16 %v144
    %v447 = vunpack.c.l.b16 %v145
    %v448 = vunpack.c.h.b16 %v145
    %v449 = vunpack.c.l.b16 %v146
    %v450 = vunpack.c.h.b16 %v146
    %v451 = vunpack.c.l.b16 %v147
    %v452 = vunpack.c.h.b16 %v147
    %v453 = vunpack.c.l.b16 %v148
    %v454 = vunpack.c.h.b16 %v148
    %v455 = vunpack.c.l.b16 %v149
    %v456 = vunpack.c.h.b16 %v149
    %v457 = vunpack.c.l.b16 %v150
    %v458 = vunpack.c.h.b16 %v150
    %v459 = vunpack.c.l.b16 %v151
    %v460 = vunpack.c.h.b16 %v151
    %v461 = vunpack.c.l.b16 %v152
    %v462 = vunpack.c.h.b16 %v152
    %v463 = vunpack.c.l.b16 %v153
    %v464 = vunpack.c.h.b16 %v153
    %v465 = vunpack.c.l.b16 %v154
    %v466 = vunpack.c.h.b16 %v154
    %v467 = vunpack.c.l.b16 %v155
    %v468 = vunpack.c.h.b16 %v155
    %v469 = vunpack.c.l.b16 %v156
    %v470 = vunpack.c.h.b16 %v156
    %v471 = vunpack.c.l.b16 %v157
    %v472 = vunpack.c.h.b16 %v157
    %v473 = vunpack.c.l.b16 %v158
    %v474 = vunpack.c.h.b16 %v158
    %v475 = vunpack.c.l.b16 %v159
    %v476 = vunpack.c.h.b16 %v159
    %v477 = vunpack.c.l.b16 %v160
    %v478 = vunpack.c.h.b16 %v160
    %v479 = vunpack.c.l.b16 %v161
    %v480 = vunpack.c.h.b16 %v161
    %v481 = vunpack.c.l.b16 %v162
    %v482 = vunpack.c.h.b16 %v162
    %v483 = vunpack.c.l.b16 %v163
    %v484 = vunpack.c.h.b16 %v163
    %v485 = vunpack.c.l.b16 %v164
    %v486 = vunpack.c.h.b16 %v164
    %v487 = vunpack.c.l.b16 %v165
    %v488 = vunpack.c.h.b16 %v165
    %v489 = vunpack.c.l.b16 %v166
    %v490 = vunpack.c.h.b16 %v166
    %v491 = vunpack.c.l.b16 %v167
    %v492 = vunpack.c.h.b16 %v167
    %v493 = vunpack.c.l.b16 %v168
    %v494 = vunpack.c.h.b16 %v168
    %v495 = vunpack.c.l.b16 %v169
    %v496 = vunpack.c.h.b16 %v169
    %v497 = vunpack.c.l.b16 %v170
    %v498 = vunpack.c.h.b16 %v170
    %v499 = vunpack.c.l.b16 %v171
    %v500 = vunpack.c.h.b16 %v171
    %v501 = vunpack.c.l.b16 %v172
    %v502 = vunpack.c.h.b16 %v172
    %v503 = vunpack.c.l.b16 %v173
    %v504 = vunpack.c.h.b16 %v173
    %v505 = vunpack.c.l.b16 %v174
    %v506 = vunpack.c.h.b16 %v174
    %v507 = vunpack.c.l.b16 %v175
    %v508 = vunpack.c.h.b16 %v175
    %v509 = vunpack.c.l.b16 %v176
    %v510 = vunpack.c.h.b16 %v176
    %v511 = vunpack.c.l.b16 %v177
    %v512 = vunpack.c.h.b16 %v177
    %v513 = vunpack.c.l.b16 %v178
    %v514 = vunpack.c.h.b16 %v178
    %v515 = vunpack.c.l.b16 %v179
    %v516 = vunpack.c.h.b16 %v179
    %v517 = vunpack.c.l.b16 %v180
    %v518 = vunpack.c.h.b16 %v180
    %v519 = vunpack.c.l.b16 %v181
    %v520 = vunpack.c.h.b16 %v181
    %v521 = vunpack.c.l.b16 %v182
    %v522 = vunpack.c.h.b16 %v182
    %v523 = vunpack.c.l.b16 %v183
    %v524 = vunpack.c.h.b16 %v183
    %v525 = vunpack.c.l.b16 %v184
    %v526 = vunpack.c.h.b16 %v184
    %v527 = vunpack.c.l.b16 %v185
    %v528 = vunpack.c.h.b16 %v185
    %v529 = vunpack.c.l.b16 %v186
    %v530 = vunpack.c.h.b16 %v186
    %v531 = vunpack.c.l.b16 %v187
    %v532 = vunpack.c.h.b16 %v187
    %v533 = vunpack.c.l.b16 %v188
    %v534 = vunpack.c.h.b16 %v188
    %v535 = vunpack.c.l.b16 %v189
    %v536 = vunpack.c.h.b16 %v189
    %v537 = vunpack.c.l.b16 %v190
    %v538 = vunpack.c.h.b16 %v190
    %v539 = vunpack.c.l.b16 %v191
    %v540 = vunpack.c.h.b16 %v191
    %v541 = vunpack.c.l.b16 %v192
    %v542 = vunpack.c.h.b16 %v192
    %v543 = vunpack.c.l.b16 %v193
    %v544 = vunpack.c.h.b16 %v193
    %v545 = vunpack.c.l.b16 %v194
    %v546 = vunpack.c.h.b16 %v194
    %v547 = vunpack.c.l.b16 %v195
    %v548 = vunpack.c.h.b16 %v195
    %v549 = vunpack.c.l.b16 %v196
    %v550 = vunpack.c.h.b16 %v196
    %v551 = vunpack.c.l.b16 %v197
    %v552 = vunpack.c.h.b16 %v197
    %v553 = vunpack.c.l.b16 %v198
    %v554 = vunpack.c.h.b16 %v198
    %v555 = vunpack.c.l.b16 %v199
    %v556 = vunpack.c.h.b16 %v199
    %v557 = vunpack.c.l.b16 %v200
    %v558 = vunpack.c.h.b16 %v200
    %v559 = vunpack.c.l.b16 %v201
    %v560 = vunpack.c.h.b16 %v201
    %v561 = vunpack.c.l.b16 %v202
    %v562 = vunpack.c.h.b16 %v202
    %v563 = vunpack.c.l.b16 %v203
    %v564 = vunpack.c.h.b16 %v203
    %v565 = vunpack.c.l.b16 %v204
    %v566 = vunpack.c.h.b16 %v204
    %v567 = vunpack.c.l.b16 %v205
    %v568 = vunpack.c.h.b16 %v205
    %v569 = vunpack.c.l.b16 %v206
    %v570 = vunpack.c.h.b16 %v206
    %v571 = vunpack.c.l.b16 %v207
    %v572 = vunpack.c.h.b16 %v207
    %v573 = vunpack.c.l.b16 %v208
    %v574 = vunpack.c.h.b16 %v208
    %v575 = vunpack.c.l.b16 %v209
    %v576 = vunpack.c.h.b16 %v209
    %v577 = vunpack.c.l.b16 %v210
    %v578 = vunpack.c.h.b16 %v210
    %v579 = vunpack.c.l.b16 %v211
    %v580 = vunpack.c.h.b16 %v211
    %v581 = vunpack.c.l.b16 %v212
    %v582 = vunpack.c.h.b16 %v212
    %v583 = vunpack.c.l.b16 %v213
    %v584 = vunpack.c.h.b16 %v213
    %v585 = vunpack.c.l.b16 %v214
    %v586 = vunpack.c.h.b16 %v214
    %v587 = vunpack.c.l.b16 %v215
    %v588 = vunpack.c.h.b16 %v215
    %v589 = vunpack.c.l.b16 %v216
    %v590 = vunpack.c.h.b16 %v216
    %v591 = vunpack.c.l.b16 %v217
    %v592 = vunpack.c.h.b16 %v217
    %v593 = vunpack.c.l.b16 %v218
    %v594 = vunpack.c.h.b16 %v218
    %v595 = vunpack.c.l.b16 %v219
    %v596 = vunpack.c.h.b16 %v219
    %v597 = vunpack.c.l.b16 %v220
    %v598 = vunpack.c.h.b16 %v220
    %v599 = vunpack.c.l.b16 %v221
    %v600 = vunpack.c.h.b16 %v221
    %v601 = vunpack.c.l.b16 %v222
    %v602 = vunpack.c.h.b16 %v222
    %v603 = vunpack.c.l.b16 %v223
    %v604 = vunpack.c.h.b16 %v223
    %v605 = vunpack.c.l.b16 %v224
    %v606 = vunpack.c.h.b16 %v224
    %v607 = vunpack.c.l.b16 %v225
    %v608 = vunpack.c.h.b16 %v225
    %v609 = vunpack.c.l.b16 %v226
    %v610 = vunpack.c.h.b16 %v226
    %v611 = vunpack.c.l.b16 %v227
    %v612 = vunpack.c.h.b16 %v227
    %v613 = vunpack.c.l.b16 %v228
    %v614 = vunpack.c.h.b16 %v228
    %v615 = vpack.c.b16 %v375, %v359
    %v616 = vpack.c.b16 %v376, %v360
    %v617 = vpack.c.b16 %v377, %v361
    %v618 = vpack.c.b16 %v378, %v362
    %v619 = vpack.c.b16 %v379, %v363
    %v620 = vpack.c.b16 %v380, %v364
    %v621 = vpack.c.b16 %v381, %v365
    %v622 = vpack.c.b16 %v382, %v366
    %v623 = vpack.c.b16 %v383, %v367
    %v624 = vpack.c.b16 %v384, %v368
    %v625 = vpack.c.b16 %v385, %v369
    %v626 = vpack.c.b16 %v386, %v370
    %v627 = vpack.c.b16 %v387, %v371
    %v628 = vpack.c.b16 %v388, %v372
    %v629 = vpack.c.b16 %v389, %v373
    %v630 = vpack.c.b16 %v390, %v374
    %v631 = vpack.c.b16 %v407, %v391
    %v632 = vpack.c.b16 %v408, %v392
    %v633 = vpack.c.b16 %v409, %v393
    %v634 = vpack.c.b16 %v410, %v394
    %v635 = vpack.c.b16 %v411, %v395
    %v636 = vpack.c.b16 %v412, %v396
    %v637 = vpack.c.b16 %v413, %v397
    %v638 = vpack.c.b16 %v414, %v398
    %v639 = vpack.c.b16 %v415, %v399
    %v640 = vpack.c.b16 %v416, %v400
    %v641 = vpack.c.b16 %v417, %v401
    %v642 = vpack.c.b16 %v418, %v402
    %v643 = vpack.c.b16 %v419, %v403
    %v644 = vpack.c.b16 %v420, %v404
    %v645 = vpack.c.b16 %v421, %v405
    %v646 = vpack.c.b16 %v422, %v406
    %v647 = vpack.c.b16 %v439, %v423
    %v648 = vpack.c.b16 %v440, %v424
    %v649 = vpack.c.b16 %v441, %v425
    %v650 = vpack.c.b16 %v442, %v426
    %v651 = vpack.c.b16 %v443, %v427
    %v652 = vpack.c.b16 %v444, %v428
    %v653 = vpack.c.b16 %v445, %v429
    %v654 = vpack.c.b16 %v446, %v430
    %v655 = vpack.c.b16 %v447, %v431
    %v656 = vpack.c.b16 %v448, %v432
    %v657 = vpack.c.b16 %v449, %v433
    %v658 = vpack.c.b16 %v450, %v434
    %v659 = vpack.c.b16 %v451, %v435
    %v660 = vpack.c.b16 %v452, %v436
    %v661 = vpack.c.b16 %v453, %v437
    %v662 = vpack.c.b16 %v454, %v438
    %v663 = vpack.c.b16 %v471, %v455
    %v664 = vpack.c.b16 %v472, %v456
    %v665 = vpack.c.b16 %v473, %v457
    %v666 = vpack.c.b16 %v474, %v458
    %v667 = vpack.c.b16 %v475, %v459
    %v668 = vpack.c.b16 %v476, %v460
    %v669 = vpack.c.b16 %v477, %v461
    %v670 = vpack.c.b16 %v478, %v462
    %v671 = vpack.c.b16 %v479, %v463
    %v672 = vpack.c.b16 %v480, %v464
    %v673 = vpack.c.b16 %v481, %v465
    %v674 = vpack.c.b16 %v482, %v466
    %v675 = vpack.c.b16 %v483, %v467
    %v676 = vpack.c.b16 %v484, %v468
    %v677 = vpack.c.b16 %v485, %v469
    %v678 = vpack.c.b16 %v486, %v470
    %v679 = vpack.c.b16 %v503, %v487
    %v680 = vpack.c.b16 %v504, %v488
    %v681 = vpack.c.b16 %v505, %v489
    %v682 = vpack.c.b16 %v506, %v490
    %v683 = vpack.c.b16 %v507, %v491
    %v684 = vpack.c.b16 %v508, %v492
    %v685 = vpack.c.b16 %v509, %v493
    %v686 = vpack.c.b16 %v510, %v494
    %v687 = vpack.c.b16 %v511, %v495
    %v688 = vpack.c.b16 %v512, %v496
    %v689 = vpack.c.b16 %v513, %v497
    %v690 = vpack.c.b16 %v514, %v498
    %v691 = vpack.c.b16 %v515, %v499
    %v692 = vpack.c.b16 %v516, %v500
    %v693 = vpack.c.b16 %v517, %v501
    %v694 = vpack.c.b16 %v518, %v502
    %v695 = vpack.c.b16 %v535, %v519
    %v696 = vpack.c.b16 %v536, %v520
    %v697 = vpack.c.b16 %v537, %v521
    %v698 = vpack.c.b16 %v538, %v522
    %v699 = vpack.c.b16 %v539, %v523
    %v700 = vpack.c.b16 %v540, %v524
    %v701 = vpack.c.b16 %v541, %v525
    %v702 = vpack.c.b16 %v542, %v526
    %v703 = vpack.c.b16 %v543, %v527
    %v704 = vpack.c.b16 %v544, %v528
    %v705 = vpack.c.b16 %v545, %v529
    %v706 = vpack.c.b16 %v546, %v530
    %v707 = vpack.c.b16 %v547, %v531
    %v708 = vpack.c.b16 %v548, %v532
    %v709 = vpack.c.b16 %v549, %v533
    %v710 = vpack.c.b16 %v550, %v534
    %v711 = vpack.c.b16 %v567, %v551
    %v712 = vpack.c.b16 %v568, %v552
    %v713 = vpack.c.b16 %v569, %v553
    %v714 = vpack.c.b16 %v570, %v554
    %v715 = vpack.c.b16 %v571, %v555
    %v716 = vpack.c.b16 %v572, %v556
    %v717 = vpack.c.b16 %v573, %v557
    %v718 = vpack.c.b16 %v574, %v558
    %v719 = vpack.c.b16 %v575, %v559
    %v720 = vpack.c.b16 %v576, %v560
    %v721 = vpack.c.b16 %v577, %v561
    %v722 = vpack.c.b16 %v578, %v562
    %v723 = vpack.c.b16 %v579, %v563
    %v724 = vpack.c.b16 %v580, %v564
    %v725 = vpack.c.b16 %v581, %v565
    %v726 = vpack.c.b16 %v582, %v566
    %v727 = vpack.c.b16 %v599, %v583
    %v728 = vpack.c.b16 %v600, %v584
    %v729 = vpack.c.b16 %v601, %v585
    %v730 = vpack.c.b16 %v602, %v586
    %v731 = vpack.c.b16 %v603, %v587
    %v732 = vpack.c.b16 %v604, %v588
    %v733 = vpack.c.b16 %v605, %v589
    %v734 = vpack.c.b16 %v606, %v590
    %v735 = vpack.c.b16 %v607, %v591
    %v736 = vpack.c.b16 %v608, %v592
    %v737 = vpack.c.b16 %v609, %v593
    %v738 = vpack.c.b16 %v610, %v594
    %v739 = vpack.c.b16 %v611, %v595
    %v740 = vpack.c.b16 %v612, %v596
    %v741 = vpack.c.b16 %v613, %v597
    %v742 = vpack.c.b16 %v614, %v598
    %v873 = vcombine.high %v229, %v229
    %v875 = vunpack.c.l.s4 1966171168
    %v876 = vunpack.c.0.s8 %v875
    %v877 = vlaneseq
    %v878 = vshrl.u32 %v877, 7
    %v879 = vsub.s32 %v876, %v878
    %v880 = vrot.slane %v229, %v879
    %v882 = vunpack.c.l.s4 1966171168
    %v883 = vunpack.c.0.s8 %v882
    %v884 = vlaneseq
    %v885 = vshrl.u32 %v884, 7
    %v886 = vsub.s32 %v883, %v885
    %v887 = vrot.slane %v873, %v886
    %v888 = vcombine.high %v880, %v880
    %v889 = vcombine.high %v887, %v887
    %v891 = vunpack.c.l.s4 1966171168
    %v892 = vunpack.c.0.s8 %v891
    %v893 = vlaneseq
    %v894 = vshrl.u32 %v893, 7
    %v895 = vsub.s32 %v892, %v894
    %v896 = vrot.slane %v880, %v895
    %v898 = vunpack.c.l.s4 1966171168
    %v899 = vunpack.c.0.s8 %v898
    %v900 = vlaneseq
    %v901 = vshrl.u32 %v900, 7
    %v902 = vsub.s32 %v899, %v901
    %v903 = vrot.slane %v887, %v902
    %v905 = vunpack.c.l.s4 1966171168
    %v906 = vunpack.c.0.s8 %v905
    %v907 = vlaneseq
    %v908 = vshrl.u32 %v907, 7
    %v909 = vsub.s32 %v906, %v908
    %v910 = vrot.slane %v888, %v909
    %v912 = vunpack.c.l.s4 1966171168
    %v913 = vunpack.c.0.s8 %v912
    %v914 = vlaneseq
    %v915 = vshrl.u32 %v914, 7
    %v916 = vsub.s32 %v913, %v915
    %v917 = vrot.slane %v889, %v916
    %v918 = vcombine.high %v896, %v896
    %v919 = vcombine.high %v903, %v903
    %v920 = vcombine.high %v910, %v910
    %v921 = vcombine.high %v917, %v917
    %v922 = vcombine.high %v230, %v230
    %v924 = vunpack.c.l.s4 1966171168
    %v925 = vunpack.c.0.s8 %v924
    %v926 = vlaneseq
    %v927 = vshrl.u32 %v926, 7
    %v928 = vsub.s32 %v925, %v927
    %v929 = vrot.slane %v230, %v928
    %v931 = vunpack.c.l.s4 1966171168
    %v932 = vunpack.c.0.s8 %v931
    %v933 = vlaneseq
    %v934 = vshrl.u32 %v933, 7
    %v935 = vsub.s32 %v932, %v934
    %v936 = vrot.slane %v922, %v935
    %v937 = vcombine.high %v929, %v929
    %v938 = vcombine.high %v936, %v936
    %v940 = vunpack.c.l.s4 1966171168
    %v941 = vunpack.c.0.s8 %v940
    %v942 = vlaneseq
    %v943 = vshrl.u32 %v942, 7
    %v944 = vsub.s32 %v941, %v943
    %v945 = vrot.slane %v929, %v944
    %v947 = vunpack.c.l.s4 1966171168
    %v948 = vunpack.c.0.s8 %v947
    %v949 = vlaneseq
    %v950 = vshrl.u32 %v949, 7
    %v951 = vsub.s32 %v948, %v950
    %v952 = vrot.slane %v936, %v951
    %v954 = vunpack.c.l.s4 1966171168
    %v955 = vunpack.c.0.s8 %v954
    %v956 = vlaneseq
    %v957 = vshrl.u32 %v956, 7
    %v958 = vsub.s32 %v955, %v957
    %v959 = vrot.slane %v937, %v958
    %v961 = vunpack.c.l.s4 1966171168
    %v962 = vunpack.c.0.s8 %v961
    %v963 = vlaneseq
    %v964 = vshrl.u32 %v963, 7
    %v965 = vsub.s32 %v962, %v964
    %v966 = vrot.slane %v938, %v965
    %v967 = vcombine.high %v945, %v945
    %v968 = vcombine.high %v952, %v952
    %v969 = vcombine.high %v959, %v959
    %v970 = vcombine.high %v966, %v966
    %987 = vmatprep.subr.bf16.mxu0 0
    %988 = vmatpush1.bf16.xpose.msra.mxu0 0
    %989 = vmatprep.subr.bf16.mxu0 0
    %990 = vmatpush1.bf16.xpose.msra.mxu0 0
    %991 = vmatprep.subr.bf16.mxu0 0
    %992 = vmatpush1.bf16.xpose.msra.mxu0 0
    %993 = vmatprep.subr.bf16.mxu0 0
    %994 = vmatpush1.bf16.xpose.msra.mxu0 0
    %995 = vmatprep.subr.bf16.mxu0 0
    %996 = vmatpush1.bf16.xpose.msra.mxu0 0
    %997 = vmatprep.subr.bf16.mxu0 0
    %998 = vmatpush1.bf16.xpose.msra.mxu0 0
    %999 = vmatprep.subr.bf16.mxu0 0
    %1000 = vmatpush1.bf16.xpose.msra.mxu0 0
    %1001 = vmatprep.subr.bf16.mxu0 %v910
    %1002 = vmatpush1.bf16.xpose.msra.mxu0 %v896
    %1003 = vmatprep.subr.bf16.mxu0 0
    %1004 = vmatpush2.bf16.xpose.msra.mxu0 0
    %1005 = vmatprep.subr.bf16.mxu0 0
    %1006 = vmatpush2.bf16.xpose.msra.mxu0 0
    %1007 = vmatprep.subr.bf16.mxu0 0
    %1008 = vmatpush2.bf16.xpose.msra.mxu0 0
    %1009 = vmatprep.subr.bf16.mxu0 0
    %1010 = vmatpush2.bf16.xpose.msra.mxu0 0
    %1011 = vmatprep.subr.bf16.mxu0 0
    %1012 = vmatpush2.bf16.xpose.msra.mxu0 0
    %1013 = vmatprep.subr.bf16.mxu0 0
    %1014 = vmatpush2.bf16.xpose.msra.mxu0 0
    %1015 = vmatprep.subr.bf16.mxu0 0
    %1016 = vmatpush2.bf16.xpose.msra.mxu0 0
    %1017 = vmatprep.subr.bf16.mxu0 0
    %1018 = vmatpush2.bf16.xpose.msra.mxu0 0
    %1019 = vmatprep.mubr.bf16.mxu0 %v616
    %1020 = vmatmul.mubr.bf16.gmra.mxu0 %v615
    %v1021 = vpop.f32.mrf.mxu0
    %v1022 = vadd.f32 0.0, %v1021
    %v1023 = vpop.f32.mrf.mxu0
    %v1024 = vpop.f32.mrf.mxu0
    %v1025 = vadd.f32 0.0, %v1024
    %v1026 = vpop.f32.mrf.mxu0
    %1027 = vmatprep.mubr.bf16.mxu0 %v632
    %1028 = vmatmul.mubr.bf16.gmra.mxu0 %v631
    %v1029 = vpop.f32.mrf.mxu0
    %v1030 = vadd.f32 0.0, %v1029
    %v1031 = vpop.f32.mrf.mxu0
    %v1032 = vpop.f32.mrf.mxu0
    %v1033 = vadd.f32 0.0, %v1032
    %v1034 = vpop.f32.mrf.mxu0
    %1035 = vmatprep.mubr.bf16.mxu0 %v648
    %1036 = vmatmul.mubr.bf16.gmra.mxu0 %v647
    %v1037 = vpop.f32.mrf.mxu0
    %v1038 = vadd.f32 0.0, %v1037
    %v1039 = vpop.f32.mrf.mxu0
    %v1040 = vpop.f32.mrf.mxu0
    %v1041 = vadd.f32 0.0, %v1040
    %v1042 = vpop.f32.mrf.mxu0
    %1043 = vmatprep.mubr.bf16.mxu0 %v664
    %1044 = vmatmul.mubr.bf16.gmra.mxu0 %v663
    %v1045 = vpop.f32.mrf.mxu0
    %v1046 = vadd.f32 0.0, %v1045
    %v1047 = vpop.f32.mrf.mxu0
    %v1048 = vpop.f32.mrf.mxu0
    %v1049 = vadd.f32 0.0, %v1048
    %v1050 = vpop.f32.mrf.mxu0
    %1051 = vmatprep.mubr.bf16.mxu0 %v680
    %1052 = vmatmul.mubr.bf16.gmra.mxu0 %v679
    %v1053 = vpop.f32.mrf.mxu0
    %v1054 = vadd.f32 0.0, %v1053
    %v1055 = vpop.f32.mrf.mxu0
    %v1056 = vpop.f32.mrf.mxu0
    %v1057 = vadd.f32 0.0, %v1056
    %v1058 = vpop.f32.mrf.mxu0
    %1059 = vmatprep.mubr.bf16.mxu0 %v696
    %1060 = vmatmul.mubr.bf16.gmra.mxu0 %v695
    %v1061 = vpop.f32.mrf.mxu0
    %v1062 = vadd.f32 0.0, %v1061
    %v1063 = vpop.f32.mrf.mxu0
    %v1064 = vpop.f32.mrf.mxu0
    %v1065 = vadd.f32 0.0, %v1064
    %v1066 = vpop.f32.mrf.mxu0
    %1067 = vmatprep.mubr.bf16.mxu0 %v712
    %1068 = vmatmul.mubr.bf16.gmra.mxu0 %v711
    %v1069 = vpop.f32.mrf.mxu0
    %v1070 = vadd.f32 0.0, %v1069
    %v1071 = vpop.f32.mrf.mxu0
    %v1072 = vpop.f32.mrf.mxu0
    %v1073 = vadd.f32 0.0, %v1072
    %v1074 = vpop.f32.mrf.mxu0
    %1075 = vmatprep.mubr.bf16.mxu0 %v728
    %1076 = vmatmul.mubr.bf16.gmra.mxu0 %v727
    %v1077 = vpop.f32.mrf.mxu0
    %v1078 = vadd.f32 0.0, %v1077
    %v1079 = vpop.f32.mrf.mxu0
    %v1080 = vpop.f32.mrf.mxu0
    %v1081 = vadd.f32 0.0, %v1080
    %v1082 = vpop.f32.mrf.mxu0
    %1083 = vdwg.mxu0
    %1084 = vmatprep.subr.bf16.mxu0 0
    %1085 = vmatpush1.bf16.xpose.msra.mxu0 0
    %1086 = vmatprep.subr.bf16.mxu0 0
    %1087 = vmatpush1.bf16.xpose.msra.mxu0 0
    %1088 = vmatprep.subr.bf16.mxu0 0
    %1089 = vmatpush1.bf16.xpose.msra.mxu0 0
    %1090 = vmatprep.subr.bf16.mxu0 0
    %1091 = vmatpush1.bf16.xpose.msra.mxu0 0
    %1092 = vmatprep.subr.bf16.mxu0 0
    %1093 = vmatpush1.bf16.xpose.msra.mxu0 0
    %1094 = vmatprep.subr.bf16.mxu0 0
    %1095 = vmatpush1.bf16.xpose.msra.mxu0 0
    %1096 = vmatprep.subr.bf16.mxu0 0
    %1097 = vmatpush1.bf16.xpose.msra.mxu0 0
    %1098 = vmatprep.subr.bf16.mxu0 %v920
    %1099 = vmatpush1.bf16.xpose.msra.mxu0 %v918
    %1100 = vmatprep.subr.bf16.mxu0 0
    %1101 = vmatpush2.bf16.xpose.msra.mxu0 0
    %1102 = vmatprep.subr.bf16.mxu0 0
    %1103 = vmatpush2.bf16.xpose.msra.mxu0 0
    %1104 = vmatprep.subr.bf16.mxu0 0
    %1105 = vmatpush2.bf16.xpose.msra.mxu0 0
    %1106 = vmatprep.subr.bf16.mxu0 0
    %1107 = vmatpush2.bf16.xpose.msra.mxu0 0
    %1108 = vmatprep.subr.bf16.mxu0 0
    %1109 = vmatpush2.bf16.xpose.msra.mxu0 0
    %1110 = vmatprep.subr.bf16.mxu0 0
    %1111 = vmatpush2.bf16.xpose.msra.mxu0 0
    %1112 = vmatprep.subr.bf16.mxu0 0
    %1113 = vmatpush2.bf16.xpose.msra.mxu0 0
    %1114 = vmatprep.subr.bf16.mxu0 0
    %1115 = vmatpush2.bf16.xpose.msra.mxu0 0
    %1116 = vmatprep.mubr.bf16.mxu0 %v618
    %1117 = vmatmul.mubr.bf16.gmra.mxu0 %v617
    %v1118 = vpop.f32.mrf.mxu0
    %v1119 = vadd.f32 %v1022, %v1118
    %v1120 = vpop.f32.mrf.mxu0
    %v1121 = vpop.f32.mrf.mxu0
    %v1122 = vadd.f32 %v1025, %v1121
    %v1123 = vpop.f32.mrf.mxu0
    %1124 = vmatprep.mubr.bf16.mxu0 %v634
    %1125 = vmatmul.mubr.bf16.gmra.mxu0 %v633
    %v1126 = vpop.f32.mrf.mxu0
    %v1127 = vadd.f32 %v1030, %v1126
    %v1128 = vpop.f32.mrf.mxu0
    %v1129 = vpop.f32.mrf.mxu0
    %v1130 = vadd.f32 %v1033, %v1129
    %v1131 = vpop.f32.mrf.mxu0
    %1132 = vmatprep.mubr.bf16.mxu0 %v650
    %1133 = vmatmul.mubr.bf16.gmra.mxu0 %v649
    %v1134 = vpop.f32.mrf.mxu0
    %v1135 = vadd.f32 %v1038, %v1134
    %v1136 = vpop.f32.mrf.mxu0
    %v1137 = vpop.f32.mrf.mxu0
    %v1138 = vadd.f32 %v1041, %v1137
    %v1139 = vpop.f32.mrf.mxu0
    %1140 = vmatprep.mubr.bf16.mxu0 %v666
    %1141 = vmatmul.mubr.bf16.gmra.mxu0 %v665
    %v1142 = vpop.f32.mrf.mxu0
    %v1143 = vadd.f32 %v1046, %v1142
    %v1144 = vpop.f32.mrf.mxu0
    %v1145 = vpop.f32.mrf.mxu0
    %v1146 = vadd.f32 %v1049, %v1145
    %v1147 = vpop.f32.mrf.mxu0
    %1148 = vmatprep.mubr.bf16.mxu0 %v682
    %1149 = vmatmul.mubr.bf16.gmra.mxu0 %v681
    %v1150 = vpop.f32.mrf.mxu0
    %v1151 = vadd.f32 %v1054, %v1150
    %v1152 = vpop.f32.mrf.mxu0
    %v1153 = vpop.f32.mrf.mxu0
    %v1154 = vadd.f32 %v1057, %v1153
    %v1155 = vpop.f32.mrf.mxu0
    %1156 = vmatprep.mubr.bf16.mxu0 %v698
    %1157 = vmatmul.mubr.bf16.gmra.mxu0 %v697
    %v1158 = vpop.f32.mrf.mxu0
    %v1159 = vadd.f32 %v1062, %v1158
    %v1160 = vpop.f32.mrf.mxu0
    %v1161 = vpop.f32.mrf.mxu0
    %v1162 = vadd.f32 %v1065, %v1161
    %v1163 = vpop.f32.mrf.mxu0
    %1164 = vmatprep.mubr.bf16.mxu0 %v714
    %1165 = vmatmul.mubr.bf16.gmra.mxu0 %v713
    %v1166 = vpop.f32.mrf.mxu0
    %v1167 = vadd.f32 %v1070, %v1166
    %v1168 = vpop.f32.mrf.mxu0
    %v1169 = vpop.f32.mrf.mxu0
    %v1170 = vadd.f32 %v1073, %v1169
    %v1171 = vpop.f32.mrf.mxu0
    %1172 = vmatprep.mubr.bf16.mxu0 %v730
    %1173 = vmatmul.mubr.bf16.gmra.mxu0 %v729
    %v1174 = vpop.f32.mrf.mxu0
    %v1175 = vadd.f32 %v1078, %v1174
    %v1176 = vpop.f32.mrf.mxu0
    %v1177 = vpop.f32.mrf.mxu0
    %v1178 = vadd.f32 %v1081, %v1177
    %v1179 = vpop.f32.mrf.mxu0
    %1180 = vdwg.mxu0
    %1181 = vmatprep.subr.bf16.mxu0 0
    %1182 = vmatpush1.bf16.xpose.msra.mxu0 0
    %1183 = vmatprep.subr.bf16.mxu0 0
    %1184 = vmatpush1.bf16.xpose.msra.mxu0 0
    %1185 = vmatprep.subr.bf16.mxu0 0
    %1186 = vmatpush1.bf16.xpose.msra.mxu0 0
    %1187 = vmatprep.subr.bf16.mxu0 0
    %1188 = vmatpush1.bf16.xpose.msra.mxu0 0
    %1189 = vmatprep.subr.bf16.mxu0 0
    %1190 = vmatpush1.bf16.xpose.msra.mxu0 0
    %1191 = vmatprep.subr.bf16.mxu0 0
    %1192 = vmatpush1.bf16.xpose.msra.mxu0 0
    %1193 = vmatprep.subr.bf16.mxu0 0
    %1194 = vmatpush1.bf16.xpose.msra.mxu0 0
    %1195 = vmatprep.subr.bf16.mxu0 %v917
    %1196 = vmatpush1.bf16.xpose.msra.mxu0 %v903
    %1197 = vmatprep.subr.bf16.mxu0 0
    %1198 = vmatpush2.bf16.xpose.msra.mxu0 0
    %1199 = vmatprep.subr.bf16.mxu0 0
    %1200 = vmatpush2.bf16.xpose.msra.mxu0 0
    %1201 = vmatprep.subr.bf16.mxu0 0
    %1202 = vmatpush2.bf16.xpose.msra.mxu0 0
    %1203 = vmatprep.subr.bf16.mxu0 0
    %1204 = vmatpush2.bf16.xpose.msra.mxu0 0
    %1205 = vmatprep.subr.bf16.mxu0 0
    %1206 = vmatpush2.bf16.xpose.msra.mxu0 0
    %1207 = vmatprep.subr.bf16.mxu0 0
    %1208 = vmatpush2.bf16.xpose.msra.mxu0 0
    %1209 = vmatprep.subr.bf16.mxu0 0
    %1210 = vmatpush2.bf16.xpose.msra.mxu0 0
    %1211 = vmatprep.subr.bf16.mxu0 0
    %1212 = vmatpush2.bf16.xpose.msra.mxu0 0
    %1213 = vmatprep.mubr.bf16.mxu0 %v620
    %1214 = vmatmul.mubr.bf16.gmra.mxu0 %v619
    %v1215 = vpop.f32.mrf.mxu0
    %v1216 = vadd.f32 %v1119, %v1215
    %v1217 = vpop.f32.mrf.mxu0
    %v1218 = vpop.f32.mrf.mxu0
    %v1219 = vadd.f32 %v1122, %v1218
    %v1220 = vpop.f32.mrf.mxu0
    %1221 = vmatprep.mubr.bf16.mxu0 %v636
    %1222 = vmatmul.mubr.bf16.gmra.mxu0 %v635
    %v1223 = vpop.f32.mrf.mxu0
    %v1224 = vadd.f32 %v1127, %v1223
    %v1225 = vpop.f32.mrf.mxu0
    %v1226 = vpop.f32.mrf.mxu0
    %v1227 = vadd.f32 %v1130, %v1226
    %v1228 = vpop.f32.mrf.mxu0
    %1229 = vmatprep.mubr.bf16.mxu0 %v652
    %1230 = vmatmul.mubr.bf16.gmra.mxu0 %v651
    %v1231 = vpop.f32.mrf.mxu0
    %v1232 = vadd.f32 %v1135, %v1231
    %v1233 = vpop.f32.mrf.mxu0
    %v1234 = vpop.f32.mrf.mxu0
    %v1235 = vadd.f32 %v1138, %v1234
    %v1236 = vpop.f32.mrf.mxu0
    %1237 = vmatprep.mubr.bf16.mxu0 %v668
    %1238 = vmatmul.mubr.bf16.gmra.mxu0 %v667
    %v1239 = vpop.f32.mrf.mxu0
    %v1240 = vadd.f32 %v1143, %v1239
    %v1241 = vpop.f32.mrf.mxu0
    %v1242 = vpop.f32.mrf.mxu0
    %v1243 = vadd.f32 %v1146, %v1242
    %v1244 = vpop.f32.mrf.mxu0
    %1245 = vmatprep.mubr.bf16.mxu0 %v684
    %1246 = vmatmul.mubr.bf16.gmra.mxu0 %v683
    %v1247 = vpop.f32.mrf.mxu0
    %v1248 = vadd.f32 %v1151, %v1247
    %v1249 = vpop.f32.mrf.mxu0
    %v1250 = vpop.f32.mrf.mxu0
    %v1251 = vadd.f32 %v1154, %v1250
    %v1252 = vpop.f32.mrf.mxu0
    %1253 = vmatprep.mubr.bf16.mxu0 %v700
    %1254 = vmatmul.mubr.bf16.gmra.mxu0 %v699
    %v1255 = vpop.f32.mrf.mxu0
    %v1256 = vadd.f32 %v1159, %v1255
    %v1257 = vpop.f32.mrf.mxu0
    %v1258 = vpop.f32.mrf.mxu0
    %v1259 = vadd.f32 %v1162, %v1258
    %v1260 = vpop.f32.mrf.mxu0
    %1261 = vmatprep.mubr.bf16.mxu0 %v716
    %1262 = vmatmul.mubr.bf16.gmra.mxu0 %v715
    %v1263 = vpop.f32.mrf.mxu0
    %v1264 = vadd.f32 %v1167, %v1263
    %v1265 = vpop.f32.mrf.mxu0
    %v1266 = vpop.f32.mrf.mxu0
    %v1267 = vadd.f32 %v1170, %v1266
    %v1268 = vpop.f32.mrf.mxu0
    %1269 = vmatprep.mubr.bf16.mxu0 %v732
    %1270 = vmatmul.mubr.bf16.gmra.mxu0 %v731
    %v1271 = vpop.f32.mrf.mxu0
    %v1272 = vadd.f32 %v1175, %v1271
    %v1273 = vpop.f32.mrf.mxu0
    %v1274 = vpop.f32.mrf.mxu0
    %v1275 = vadd.f32 %v1178, %v1274
    %v1276 = vpop.f32.mrf.mxu0
    %1277 = vdwg.mxu0
    %1278 = vmatprep.subr.bf16.mxu0 0
    %1279 = vmatpush1.bf16.xpose.msra.mxu0 0
    %1280 = vmatprep.subr.bf16.mxu0 0
    %1281 = vmatpush1.bf16.xpose.msra.mxu0 0
    %1282 = vmatprep.subr.bf16.mxu0 0
    %1283 = vmatpush1.bf16.xpose.msra.mxu0 0
    %1284 = vmatprep.subr.bf16.mxu0 0
    %1285 = vmatpush1.bf16.xpose.msra.mxu0 0
    %1286 = vmatprep.subr.bf16.mxu0 0
    %1287 = vmatpush1.bf16.xpose.msra.mxu0 0
    %1288 = vmatprep.subr.bf16.mxu0 0
    %1289 = vmatpush1.bf16.xpose.msra.mxu0 0
    %1290 = vmatprep.subr.bf16.mxu0 0
    %1291 = vmatpush1.bf16.xpose.msra.mxu0 0
    %1292 = vmatprep.subr.bf16.mxu0 %v921
    %1293 = vmatpush1.bf16.xpose.msra.mxu0 %v919
    %1294 = vmatprep.subr.bf16.mxu0 0
    %1295 = vmatpush2.bf16.xpose.msra.mxu0 0
    %1296 = vmatprep.subr.bf16.mxu0 0
    %1297 = vmatpush2.bf16.xpose.msra.mxu0 0
    %1298 = vmatprep.subr.bf16.mxu0 0
    %1299 = vmatpush2.bf16.xpose.msra.mxu0 0
    %1300 = vmatprep.subr.bf16.mxu0 0
    %1301 = vmatpush2.bf16.xpose.msra.mxu0 0
    %1302 = vmatprep.subr.bf16.mxu0 0
    %1303 = vmatpush2.bf16.xpose.msra.mxu0 0
    %1304 = vmatprep.subr.bf16.mxu0 0
    %1305 = vmatpush2.bf16.xpose.msra.mxu0 0
    %1306 = vmatprep.subr.bf16.mxu0 0
    %1307 = vmatpush2.bf16.xpose.msra.mxu0 0
    %1308 = vmatprep.subr.bf16.mxu0 0
    %1309 = vmatpush2.bf16.xpose.msra.mxu0 0
    %1310 = vmatprep.mubr.bf16.mxu0 %v622
    %1311 = vmatmul.mubr.bf16.gmra.mxu0 %v621
    %v1312 = vpop.f32.mrf.mxu0
    %v1313 = vadd.f32 %v1216, %v1312
    %v1314 = vpop.f32.mrf.mxu0
    %v1315 = vpop.f32.mrf.mxu0
    %v1316 = vadd.f32 %v1219, %v1315
    %v1317 = vpop.f32.mrf.mxu0
    %1318 = vmatprep.mubr.bf16.mxu0 %v638
    %1319 = vmatmul.mubr.bf16.gmra.mxu0 %v637
    %v1320 = vpop.f32.mrf.mxu0
    %v1321 = vadd.f32 %v1224, %v1320
    %v1322 = vpop.f32.mrf.mxu0
    %v1323 = vpop.f32.mrf.mxu0
    %v1324 = vadd.f32 %v1227, %v1323
    %v1325 = vpop.f32.mrf.mxu0
    %1326 = vmatprep.mubr.bf16.mxu0 %v654
    %1327 = vmatmul.mubr.bf16.gmra.mxu0 %v653
    %v1328 = vpop.f32.mrf.mxu0
    %v1329 = vadd.f32 %v1232, %v1328
    %v1330 = vpop.f32.mrf.mxu0
    %v1331 = vpop.f32.mrf.mxu0
    %v1332 = vadd.f32 %v1235, %v1331
    %v1333 = vpop.f32.mrf.mxu0
    %1334 = vmatprep.mubr.bf16.mxu0 %v670
    %1335 = vmatmul.mubr.bf16.gmra.mxu0 %v669
    %v1336 = vpop.f32.mrf.mxu0
    %v1337 = vadd.f32 %v1240, %v1336
    %v1338 = vpop.f32.mrf.mxu0
    %v1339 = vpop.f32.mrf.mxu0
    %v1340 = vadd.f32 %v1243, %v1339
    %v1341 = vpop.f32.mrf.mxu0
    %1342 = vmatprep.mubr.bf16.mxu0 %v686
    %1343 = vmatmul.mubr.bf16.gmra.mxu0 %v685
    %v1344 = vpop.f32.mrf.mxu0
    %v1345 = vadd.f32 %v1248, %v1344
    %v1346 = vpop.f32.mrf.mxu0
    %v1347 = vpop.f32.mrf.mxu0
    %v1348 = vadd.f32 %v1251, %v1347
    %v1349 = vpop.f32.mrf.mxu0
    %1350 = vmatprep.mubr.bf16.mxu0 %v702
    %1351 = vmatmul.mubr.bf16.gmra.mxu0 %v701
    %v1352 = vpop.f32.mrf.mxu0
    %v1353 = vadd.f32 %v1256, %v1352
    %v1354 = vpop.f32.mrf.mxu0
    %v1355 = vpop.f32.mrf.mxu0
    %v1356 = vadd.f32 %v1259, %v1355
    %v1357 = vpop.f32.mrf.mxu0
    %1358 = vmatprep.mubr.bf16.mxu0 %v718
    %1359 = vmatmul.mubr.bf16.gmra.mxu0 %v717
    %v1360 = vpop.f32.mrf.mxu0
    %v1361 = vadd.f32 %v1264, %v1360
    %v1362 = vpop.f32.mrf.mxu0
    %v1363 = vpop.f32.mrf.mxu0
    %v1364 = vadd.f32 %v1267, %v1363
    %v1365 = vpop.f32.mrf.mxu0
    %1366 = vmatprep.mubr.bf16.mxu0 %v734
    %1367 = vmatmul.mubr.bf16.gmra.mxu0 %v733
    %v1368 = vpop.f32.mrf.mxu0
    %v1369 = vadd.f32 %v1272, %v1368
    %v1370 = vpop.f32.mrf.mxu0
    %v1371 = vpop.f32.mrf.mxu0
    %v1372 = vadd.f32 %v1275, %v1371
    %v1373 = vpop.f32.mrf.mxu0
    %1374 = vdwg.mxu0
    %1375 = vmatprep.subr.bf16.mxu0 0
    %1376 = vmatpush1.bf16.xpose.msra.mxu0 0
    %1377 = vmatprep.subr.bf16.mxu0 0
    %1378 = vmatpush1.bf16.xpose.msra.mxu0 0
    %1379 = vmatprep.subr.bf16.mxu0 0
    %1380 = vmatpush1.bf16.xpose.msra.mxu0 0
    %1381 = vmatprep.subr.bf16.mxu0 0
    %1382 = vmatpush1.bf16.xpose.msra.mxu0 0
    %1383 = vmatprep.subr.bf16.mxu0 0
    %1384 = vmatpush1.bf16.xpose.msra.mxu0 0
    %1385 = vmatprep.subr.bf16.mxu0 0
    %1386 = vmatpush1.bf16.xpose.msra.mxu0 0
    %1387 = vmatprep.subr.bf16.mxu0 0
    %1388 = vmatpush1.bf16.xpose.msra.mxu0 0
    %1389 = vmatprep.subr.bf16.mxu0 %v959
    %1390 = vmatpush1.bf16.xpose.msra.mxu0 %v945
    %1391 = vmatprep.subr.bf16.mxu0 0
    %1392 = vmatpush2.bf16.xpose.msra.mxu0 0
    %1393 = vmatprep.subr.bf16.mxu0 0
    %1394 = vmatpush2.bf16.xpose.msra.mxu0 0
    %1395 = vmatprep.subr.bf16.mxu0 0
    %1396 = vmatpush2.bf16.xpose.msra.mxu0 0
    %1397 = vmatprep.subr.bf16.mxu0 0
    %1398 = vmatpush2.bf16.xpose.msra.mxu0 0
    %1399 = vmatprep.subr.bf16.mxu0 0
    %1400 = vmatpush2.bf16.xpose.msra.mxu0 0
    %1401 = vmatprep.subr.bf16.mxu0 0
    %1402 = vmatpush2.bf16.xpose.msra.mxu0 0
    %1403 = vmatprep.subr.bf16.mxu0 0
    %1404 = vmatpush2.bf16.xpose.msra.mxu0 0
    %1405 = vmatprep.subr.bf16.mxu0 0
    %1406 = vmatpush2.bf16.xpose.msra.mxu0 0
    %1407 = vmatprep.mubr.bf16.mxu0 %v624
    %1408 = vmatmul.mubr.bf16.gmra.mxu0 %v623
    %v1409 = vpop.f32.mrf.mxu0
    %v1410 = vadd.f32 %v1313, %v1409
    %v1411 = vpop.f32.mrf.mxu0
    %v1412 = vpop.f32.mrf.mxu0
    %v1413 = vadd.f32 %v1316, %v1412
    %v1414 = vpop.f32.mrf.mxu0
    %1415 = vmatprep.mubr.bf16.mxu0 %v640
    %1416 = vmatmul.mubr.bf16.gmra.mxu0 %v639
    %v1417 = vpop.f32.mrf.mxu0
    %v1418 = vadd.f32 %v1321, %v1417
    %v1419 = vpop.f32.mrf.mxu0
    %v1420 = vpop.f32.mrf.mxu0
    %v1421 = vadd.f32 %v1324, %v1420
    %v1422 = vpop.f32.mrf.mxu0
    %1423 = vmatprep.mubr.bf16.mxu0 %v656
    %1424 = vmatmul.mubr.bf16.gmra.mxu0 %v655
    %v1425 = vpop.f32.mrf.mxu0
    %v1426 = vadd.f32 %v1329, %v1425
    %v1427 = vpop.f32.mrf.mxu0
    %v1428 = vpop.f32.mrf.mxu0
    %v1429 = vadd.f32 %v1332, %v1428
    %v1430 = vpop.f32.mrf.mxu0
    %1431 = vmatprep.mubr.bf16.mxu0 %v672
    %1432 = vmatmul.mubr.bf16.gmra.mxu0 %v671
    %v1433 = vpop.f32.mrf.mxu0
    %v1434 = vadd.f32 %v1337, %v1433
    %v1435 = vpop.f32.mrf.mxu0
    %v1436 = vpop.f32.mrf.mxu0
    %v1437 = vadd.f32 %v1340, %v1436
    %v1438 = vpop.f32.mrf.mxu0
    %1439 = vmatprep.mubr.bf16.mxu0 %v688
    %1440 = vmatmul.mubr.bf16.gmra.mxu0 %v687
    %v1441 = vpop.f32.mrf.mxu0
    %v1442 = vadd.f32 %v1345, %v1441
    %v1443 = vpop.f32.mrf.mxu0
    %v1444 = vpop.f32.mrf.mxu0
    %v1445 = vadd.f32 %v1348, %v1444
    %v1446 = vpop.f32.mrf.mxu0
    %1447 = vmatprep.mubr.bf16.mxu0 %v704
    %1448 = vmatmul.mubr.bf16.gmra.mxu0 %v703
    %v1449 = vpop.f32.mrf.mxu0
    %v1450 = vadd.f32 %v1353, %v1449
    %v1451 = vpop.f32.mrf.mxu0
    %v1452 = vpop.f32.mrf.mxu0
    %v1453 = vadd.f32 %v1356, %v1452
    %v1454 = vpop.f32.mrf.mxu0
    %1455 = vmatprep.mubr.bf16.mxu0 %v720
    %1456 = vmatmul.mubr.bf16.gmra.mxu0 %v719
    %v1457 = vpop.f32.mrf.mxu0
    %v1458 = vadd.f32 %v1361, %v1457
    %v1459 = vpop.f32.mrf.mxu0
    %v1460 = vpop.f32.mrf.mxu0
    %v1461 = vadd.f32 %v1364, %v1460
    %v1462 = vpop.f32.mrf.mxu0
    %1463 = vmatprep.mubr.bf16.mxu0 %v736
    %1464 = vmatmul.mubr.bf16.gmra.mxu0 %v735
    %v1465 = vpop.f32.mrf.mxu0
    %v1466 = vadd.f32 %v1369, %v1465
    %v1467 = vpop.f32.mrf.mxu0
    %v1468 = vpop.f32.mrf.mxu0
    %v1469 = vadd.f32 %v1372, %v1468
    %v1470 = vpop.f32.mrf.mxu0
    %1471 = vdwg.mxu0
    %1472 = vmatprep.subr.bf16.mxu0 0
    %1473 = vmatpush1.bf16.xpose.msra.mxu0 0
    %1474 = vmatprep.subr.bf16.mxu0 0
    %1475 = vmatpush1.bf16.xpose.msra.mxu0 0
    %1476 = vmatprep.subr.bf16.mxu0 0
    %1477 = vmatpush1.bf16.xpose.msra.mxu0 0
    %1478 = vmatprep.subr.bf16.mxu0 0
    %1479 = vmatpush1.bf16.xpose.msra.mxu0 0
    %1480 = vmatprep.subr.bf16.mxu0 0
    %1481 = vmatpush1.bf16.xpose.msra.mxu0 0
    %1482 = vmatprep.subr.bf16.mxu0 0
    %1483 = vmatpush1.bf16.xpose.msra.mxu0 0
    %1484 = vmatprep.subr.bf16.mxu0 0
    %1485 = vmatpush1.bf16.xpose.msra.mxu0 0
    %1486 = vmatprep.subr.bf16.mxu0 %v969
    %1487 = vmatpush1.bf16.xpose.msra.mxu0 %v967
    %1488 = vmatprep.subr.bf16.mxu0 0
    %1489 = vmatpush2.bf16.xpose.msra.mxu0 0
    %1490 = vmatprep.subr.bf16.mxu0 0
    %1491 = vmatpush2.bf16.xpose.msra.mxu0 0
    %1492 = vmatprep.subr.bf16.mxu0 0
    %1493 = vmatpush2.bf16.xpose.msra.mxu0 0
    %1494 = vmatprep.subr.bf16.mxu0 0
    %1495 = vmatpush2.bf16.xpose.msra.mxu0 0
    %1496 = vmatprep.subr.bf16.mxu0 0
    %1497 = vmatpush2.bf16.xpose.msra.mxu0 0
    %1498 = vmatprep.subr.bf16.mxu0 0
    %1499 = vmatpush2.bf16.xpose.msra.mxu0 0
    %1500 = vmatprep.subr.bf16.mxu0 0
    %1501 = vmatpush2.bf16.xpose.msra.mxu0 0
    %1502 = vmatprep.subr.bf16.mxu0 0
    %1503 = vmatpush2.bf16.xpose.msra.mxu0 0
    %1504 = vmatprep.mubr.bf16.mxu0 %v626
    %1505 = vmatmul.mubr.bf16.gmra.mxu0 %v625
    %v1506 = vpop.f32.mrf.mxu0
    %v1507 = vadd.f32 %v1410, %v1506
    %v1508 = vpop.f32.mrf.mxu0
    %v1509 = vpop.f32.mrf.mxu0
    %v1510 = vadd.f32 %v1413, %v1509
    %v1511 = vpop.f32.mrf.mxu0
    %1512 = vmatprep.mubr.bf16.mxu0 %v642
    %1513 = vmatmul.mubr.bf16.gmra.mxu0 %v641
    %v1514 = vpop.f32.mrf.mxu0
    %v1515 = vadd.f32 %v1418, %v1514
    %v1516 = vpop.f32.mrf.mxu0
    %v1517 = vpop.f32.mrf.mxu0
    %v1518 = vadd.f32 %v1421, %v1517
    %v1519 = vpop.f32.mrf.mxu0
    %1520 = vmatprep.mubr.bf16.mxu0 %v658
    %1521 = vmatmul.mubr.bf16.gmra.mxu0 %v657
    %v1522 = vpop.f32.mrf.mxu0
    %v1523 = vadd.f32 %v1426, %v1522
    %v1524 = vpop.f32.mrf.mxu0
    %v1525 = vpop.f32.mrf.mxu0
    %v1526 = vadd.f32 %v1429, %v1525
    %v1527 = vpop.f32.mrf.mxu0
    %1528 = vmatprep.mubr.bf16.mxu0 %v674
    %1529 = vmatmul.mubr.bf16.gmra.mxu0 %v673
    %v1530 = vpop.f32.mrf.mxu0
    %v1531 = vadd.f32 %v1434, %v1530
    %v1532 = vpop.f32.mrf.mxu0
    %v1533 = vpop.f32.mrf.mxu0
    %v1534 = vadd.f32 %v1437, %v1533
    %v1535 = vpop.f32.mrf.mxu0
    %1536 = vmatprep.mubr.bf16.mxu0 %v690
    %1537 = vmatmul.mubr.bf16.gmra.mxu0 %v689
    %v1538 = vpop.f32.mrf.mxu0
    %v1539 = vadd.f32 %v1442, %v1538
    %v1540 = vpop.f32.mrf.mxu0
    %v1541 = vpop.f32.mrf.mxu0
    %v1542 = vadd.f32 %v1445, %v1541
    %v1543 = vpop.f32.mrf.mxu0
    %1544 = vmatprep.mubr.bf16.mxu0 %v706
    %1545 = vmatmul.mubr.bf16.gmra.mxu0 %v705
    %v1546 = vpop.f32.mrf.mxu0
    %v1547 = vadd.f32 %v1450, %v1546
    %v1548 = vpop.f32.mrf.mxu0
    %v1549 = vpop.f32.mrf.mxu0
    %v1550 = vadd.f32 %v1453, %v1549
    %v1551 = vpop.f32.mrf.mxu0
    %1552 = vmatprep.mubr.bf16.mxu0 %v722
    %1553 = vmatmul.mubr.bf16.gmra.mxu0 %v721
    %v1554 = vpop.f32.mrf.mxu0
    %v1555 = vadd.f32 %v1458, %v1554
    %v1556 = vpop.f32.mrf.mxu0
    %v1557 = vpop.f32.mrf.mxu0
    %v1558 = vadd.f32 %v1461, %v1557
    %v1559 = vpop.f32.mrf.mxu0
    %1560 = vmatprep.mubr.bf16.mxu0 %v738
    %1561 = vmatmul.mubr.bf16.gmra.mxu0 %v737
    %v1562 = vpop.f32.mrf.mxu0
    %v1563 = vadd.f32 %v1466, %v1562
    %v1564 = vpop.f32.mrf.mxu0
    %v1565 = vpop.f32.mrf.mxu0
    %v1566 = vadd.f32 %v1469, %v1565
    %v1567 = vpop.f32.mrf.mxu0
    %1568 = vdwg.mxu0
    %1569 = vmatprep.subr.bf16.mxu0 0
    %1570 = vmatpush1.bf16.xpose.msra.mxu0 0
    %1571 = vmatprep.subr.bf16.mxu0 0
    %1572 = vmatpush1.bf16.xpose.msra.mxu0 0
    %1573 = vmatprep.subr.bf16.mxu0 0
    %1574 = vmatpush1.bf16.xpose.msra.mxu0 0
    %1575 = vmatprep.subr.bf16.mxu0 0
    %1576 = vmatpush1.bf16.xpose.msra.mxu0 0
    %1577 = vmatprep.subr.bf16.mxu0 0
    %1578 = vmatpush1.bf16.xpose.msra.mxu0 0
    %1579 = vmatprep.subr.bf16.mxu0 0
    %1580 = vmatpush1.bf16.xpose.msra.mxu0 0
    %1581 = vmatprep.subr.bf16.mxu0 0
    %1582 = vmatpush1.bf16.xpose.msra.mxu0 0
    %1583 = vmatprep.subr.bf16.mxu0 %v966
    %1584 = vmatpush1.bf16.xpose.msra.mxu0 %v952
    %1585 = vmatprep.subr.bf16.mxu0 0
    %1586 = vmatpush2.bf16.xpose.msra.mxu0 0
    %1587 = vmatprep.subr.bf16.mxu0 0
    %1588 = vmatpush2.bf16.xpose.msra.mxu0 0
    %1589 = vmatprep.subr.bf16.mxu0 0
    %1590 = vmatpush2.bf16.xpose.msra.mxu0 0
    %1591 = vmatprep.subr.bf16.mxu0 0
    %1592 = vmatpush2.bf16.xpose.msra.mxu0 0
    %1593 = vmatprep.subr.bf16.mxu0 0
    %1594 = vmatpush2.bf16.xpose.msra.mxu0 0
    %1595 = vmatprep.subr.bf16.mxu0 0
    %1596 = vmatpush2.bf16.xpose.msra.mxu0 0
    %1597 = vmatprep.subr.bf16.mxu0 0
    %1598 = vmatpush2.bf16.xpose.msra.mxu0 0
    %1599 = vmatprep.subr.bf16.mxu0 0
    %1600 = vmatpush2.bf16.xpose.msra.mxu0 0
    %1601 = vmatprep.mubr.bf16.mxu0 %v628
    %1602 = vmatmul.mubr.bf16.gmra.mxu0 %v627
    %v1603 = vpop.f32.mrf.mxu0
    %v1604 = vadd.f32 %v1507, %v1603
    %v1605 = vpop.f32.mrf.mxu0
    %v1606 = vpop.f32.mrf.mxu0
    %v1607 = vadd.f32 %v1510, %v1606
    %v1608 = vpop.f32.mrf.mxu0
    %1609 = vmatprep.mubr.bf16.mxu0 %v644
    %1610 = vmatmul.mubr.bf16.gmra.mxu0 %v643
    %v1611 = vpop.f32.mrf.mxu0
    %v1612 = vadd.f32 %v1515, %v1611
    %v1613 = vpop.f32.mrf.mxu0
    %v1614 = vpop.f32.mrf.mxu0
    %v1615 = vadd.f32 %v1518, %v1614
    %v1616 = vpop.f32.mrf.mxu0
    %1617 = vmatprep.mubr.bf16.mxu0 %v660
    %1618 = vmatmul.mubr.bf16.gmra.mxu0 %v659
    %v1619 = vpop.f32.mrf.mxu0
    %v1620 = vadd.f32 %v1523, %v1619
    %v1621 = vpop.f32.mrf.mxu0
    %v1622 = vpop.f32.mrf.mxu0
    %v1623 = vadd.f32 %v1526, %v1622
    %v1624 = vpop.f32.mrf.mxu0
    %1625 = vmatprep.mubr.bf16.mxu0 %v676
    %1626 = vmatmul.mubr.bf16.gmra.mxu0 %v675
    %v1627 = vpop.f32.mrf.mxu0
    %v1628 = vadd.f32 %v1531, %v1627
    %v1629 = vpop.f32.mrf.mxu0
    %v1630 = vpop.f32.mrf.mxu0
    %v1631 = vadd.f32 %v1534, %v1630
    %v1632 = vpop.f32.mrf.mxu0
    %1633 = vmatprep.mubr.bf16.mxu0 %v692
    %1634 = vmatmul.mubr.bf16.gmra.mxu0 %v691
    %v1635 = vpop.f32.mrf.mxu0
    %v1636 = vadd.f32 %v1539, %v1635
    %v1637 = vpop.f32.mrf.mxu0
    %v1638 = vpop.f32.mrf.mxu0
    %v1639 = vadd.f32 %v1542, %v1638
    %v1640 = vpop.f32.mrf.mxu0
    %1641 = vmatprep.mubr.bf16.mxu0 %v708
    %1642 = vmatmul.mubr.bf16.gmra.mxu0 %v707
    %v1643 = vpop.f32.mrf.mxu0
    %v1644 = vadd.f32 %v1547, %v1643
    %v1645 = vpop.f32.mrf.mxu0
    %v1646 = vpop.f32.mrf.mxu0
    %v1647 = vadd.f32 %v1550, %v1646
    %v1648 = vpop.f32.mrf.mxu0
    %1649 = vmatprep.mubr.bf16.mxu0 %v724
    %1650 = vmatmul.mubr.bf16.gmra.mxu0 %v723
    %v1651 = vpop.f32.mrf.mxu0
    %v1652 = vadd.f32 %v1555, %v1651
    %v1653 = vpop.f32.mrf.mxu0
    %v1654 = vpop.f32.mrf.mxu0
    %v1655 = vadd.f32 %v1558, %v1654
    %v1656 = vpop.f32.mrf.mxu0
    %1657 = vmatprep.mubr.bf16.mxu0 %v740
    %1658 = vmatmul.mubr.bf16.gmra.mxu0 %v739
    %v1659 = vpop.f32.mrf.mxu0
    %v1660 = vadd.f32 %v1563, %v1659
    %v1661 = vpop.f32.mrf.mxu0
    %v1662 = vpop.f32.mrf.mxu0
    %v1663 = vadd.f32 %v1566, %v1662
    %v1664 = vpop.f32.mrf.mxu0
    %1665 = vdwg.mxu0
    %1666 = vmatprep.subr.bf16.mxu0 0
    %1667 = vmatpush1.bf16.xpose.msra.mxu0 0
    %1668 = vmatprep.subr.bf16.mxu0 0
    %1669 = vmatpush1.bf16.xpose.msra.mxu0 0
    %1670 = vmatprep.subr.bf16.mxu0 0
    %1671 = vmatpush1.bf16.xpose.msra.mxu0 0
    %1672 = vmatprep.subr.bf16.mxu0 0
    %1673 = vmatpush1.bf16.xpose.msra.mxu0 0
    %1674 = vmatprep.subr.bf16.mxu0 0
    %1675 = vmatpush1.bf16.xpose.msra.mxu0 0
    %1676 = vmatprep.subr.bf16.mxu0 0
    %1677 = vmatpush1.bf16.xpose.msra.mxu0 0
    %1678 = vmatprep.subr.bf16.mxu0 0
    %1679 = vmatpush1.bf16.xpose.msra.mxu0 0
    %1680 = vmatprep.subr.bf16.mxu0 %v970
    %1681 = vmatpush1.bf16.xpose.msra.mxu0 %v968
    %1682 = vmatprep.subr.bf16.mxu0 0
    %1683 = vmatpush2.bf16.xpose.msra.mxu0 0
    %1684 = vmatprep.subr.bf16.mxu0 0
    %1685 = vmatpush2.bf16.xpose.msra.mxu0 0
    %1686 = vmatprep.subr.bf16.mxu0 0
    %1687 = vmatpush2.bf16.xpose.msra.mxu0 0
    %1688 = vmatprep.subr.bf16.mxu0 0
    %1689 = vmatpush2.bf16.xpose.msra.mxu0 0
    %1690 = vmatprep.subr.bf16.mxu0 0
    %1691 = vmatpush2.bf16.xpose.msra.mxu0 0
    %1692 = vmatprep.subr.bf16.mxu0 0
    %1693 = vmatpush2.bf16.xpose.msra.mxu0 0
    %1694 = vmatprep.subr.bf16.mxu0 0
    %1695 = vmatpush2.bf16.xpose.msra.mxu0 0
    %1696 = vmatprep.subr.bf16.mxu0 0
    %1697 = vmatpush2.bf16.xpose.msra.mxu0 0
    %1698 = vmatprep.mubr.bf16.mxu0 %v630
    %1699 = vmatmul.mubr.bf16.gmra.mxu0 %v629
    %v1700 = vpop.f32.mrf.mxu0
    %v1701 = vadd.f32 %v1604, %v1700
    %v1702 = vpop.f32.mrf.mxu0
    %v1703 = vpop.f32.mrf.mxu0
    %v1704 = vadd.f32 %v1607, %v1703
    %v1705 = vpop.f32.mrf.mxu0
    %1706 = vmatprep.mubr.bf16.mxu0 %v646
    %1707 = vmatmul.mubr.bf16.gmra.mxu0 %v645
    %v1708 = vpop.f32.mrf.mxu0
    %v1709 = vadd.f32 %v1612, %v1708
    %v1710 = vpop.f32.mrf.mxu0
    %v1711 = vpop.f32.mrf.mxu0
    %v1712 = vadd.f32 %v1615, %v1711
    %v1713 = vpop.f32.mrf.mxu0
    %1714 = vmatprep.mubr.bf16.mxu0 %v662
    %1715 = vmatmul.mubr.bf16.gmra.mxu0 %v661
    %v1716 = vpop.f32.mrf.mxu0
    %v1717 = vadd.f32 %v1620, %v1716
    %v1718 = vpop.f32.mrf.mxu0
    %v1719 = vpop.f32.mrf.mxu0
    %v1720 = vadd.f32 %v1623, %v1719
    %v1721 = vpop.f32.mrf.mxu0
    %1722 = vmatprep.mubr.bf16.mxu0 %v678
    %1723 = vmatmul.mubr.bf16.gmra.mxu0 %v677
    %v1724 = vpop.f32.mrf.mxu0
    %v1725 = vadd.f32 %v1628, %v1724
    %v1726 = vpop.f32.mrf.mxu0
    %v1727 = vpop.f32.mrf.mxu0
    %v1728 = vadd.f32 %v1631, %v1727
    %v1729 = vpop.f32.mrf.mxu0
    %1730 = vmatprep.mubr.bf16.mxu0 %v694
    %1731 = vmatmul.mubr.bf16.gmra.mxu0 %v693
    %v1732 = vpop.f32.mrf.mxu0
    %v1733 = vadd.f32 %v1636, %v1732
    %v1734 = vpop.f32.mrf.mxu0
    %v1735 = vpop.f32.mrf.mxu0
    %v1736 = vadd.f32 %v1639, %v1735
    %v1737 = vpop.f32.mrf.mxu0
    %1738 = vmatprep.mubr.bf16.mxu0 %v710
    %1739 = vmatmul.mubr.bf16.gmra.mxu0 %v709
    %v1740 = vpop.f32.mrf.mxu0
    %v1741 = vadd.f32 %v1644, %v1740
    %v1742 = vpop.f32.mrf.mxu0
    %v1743 = vpop.f32.mrf.mxu0
    %v1744 = vadd.f32 %v1647, %v1743
    %v1745 = vpop.f32.mrf.mxu0
    %1746 = vmatprep.mubr.bf16.mxu0 %v726
    %1747 = vmatmul.mubr.bf16.gmra.mxu0 %v725
    %v1748 = vpop.f32.mrf.mxu0
    %v1749 = vadd.f32 %v1652, %v1748
    %v1750 = vpop.f32.mrf.mxu0
    %v1751 = vpop.f32.mrf.mxu0
    %v1752 = vadd.f32 %v1655, %v1751
    %v1753 = vpop.f32.mrf.mxu0
    %1754 = vmatprep.mubr.bf16.mxu0 %v742
    %1755 = vmatmul.mubr.bf16.gmra.mxu0 %v741
    %v1756 = vpop.f32.mrf.mxu0
    %v1757 = vadd.f32 %v1660, %v1756
    %v1758 = vpop.f32.mrf.mxu0
    %v1759 = vpop.f32.mrf.mxu0
    %v1760 = vadd.f32 %v1663, %v1759
    %v1761 = vpop.f32.mrf.mxu0
    %1762 = vdwg.mxu0
    %v1763 = vadd.f32 %v85, %v1701
    %v1764 = vadd.f32 %v86, %v1704
    %v1765 = vadd.f32 %v87, %v1709
    %v1766 = vadd.f32 %v88, %v1712
    %v1767 = vadd.f32 %v89, %v1717
    %v1768 = vadd.f32 %v90, %v1720
    %v1769 = vadd.f32 %v91, %v1725
    %v1770 = vadd.f32 %v92, %v1728
    %v1771 = vadd.f32 %v93, %v1733
    %v1772 = vadd.f32 %v94, %v1736
    %v1773 = vadd.f32 %v95, %v1741
    %v1774 = vadd.f32 %v96, %v1744
    %v1775 = vadd.f32 %v97, %v1749
    %v1776 = vadd.f32 %v98, %v1752
    %v1777 = vadd.f32 %v99, %v1757
    %v1778 = vadd.f32 %v100, %v1760
    %vm1779 = vcmask 15360
    %1780 = vst.msk [vmem:[%s60] sm:$0xff] %vm1779, %v1763
    %1781 = vst.msk [vmem:[%s60 + $0x8] sm:$0xff] %vm1779, %v1764
    %1782 = vst.msk [vmem:[%s60 + $0x10] sm:$0xff] %vm1779, %v1765
    %1783 = vst.msk [vmem:[%s60 + $0x18] sm:$0xff] %vm1779, %v1766
    %1784 = vst.msk [vmem:[%s60 + $0x20] sm:$0xff] %vm1779, %v1767
    %1785 = vst.msk [vmem:[%s60 + $0x28] sm:$0xff] %vm1779, %v1768
    %1786 = vst.msk [vmem:[%s60 + $0x30] sm:$0xff] %vm1779, %v1769
    %1787 = vst.msk [vmem:[%s60 + $0x38] sm:$0xff] %vm1779, %v1770
    %1788 = vst.msk [vmem:[%s60 + $0x40] sm:$0xff] %vm1779, %v1771
    %1789 = vst.msk [vmem:[%s60 + $0x48] sm:$0xff] %vm1779, %v1772
    %1790 = vst.msk [vmem:[%s60 + $0x50] sm:$0xff] %vm1779, %v1773
    %1791 = vst.msk [vmem:[%s60 + $0x58] sm:$0xff] %vm1779, %v1774
    %1792 = vst.msk [vmem:[%s60 + $0x60] sm:$0xff] %vm1779, %v1775
    %1793 = vst.msk [vmem:[%s60 + $0x68] sm:$0xff] %vm1779, %v1776
    %1794 = vst.msk [vmem:[%s60 + $0x70] sm:$0xff] %vm1779, %v1777
    %1795 = vst.msk [vmem:[%s60 + $0x78] sm:$0xff] %vm1779, %v1778
    %s1796 = sadd.s32 0, 0
    %s1797 = smul.u32 16, %s1796
    %p1798 = scmp.lt.s32.totalorder %s1797, 15
    %s1799 = scalar_select %p1798, %s1797, 15
    %s1800 = smul.addr %s1799, 8
    %s1801 = scalar_lea.vmem %s2, %s1800
    // Predicated region
    $region22: #{tpu_custom_call.1} parent=1 // pred_check
      _
    $region23: #{tpu_custom_call.1} parent=1 // pred_check_branch
      %1803 = sbr.rel (0) target = $region25
    $region24: #{tpu_custom_call.1} parent=1 // pred_region
      %s1804 = sadd.s32 0, 0
      %s1805 = smul.u32 16, %s1804
    $region25: #{tpu_custom_call.1} parent=1 // pred_fallthru
      _
    // Predicated region
    $region26: #{tpu_custom_call.1} parent=1 // pred_check
      _
    $region27: #{tpu_custom_call.1} parent=1 // pred_check_branch
      %1807 = sbr.rel (0) target = $region29
    $region28: #{tpu_custom_call.1} parent=1 // pred_region
      %s1808 = sadd.s32 0, 0
      %s1809 = smul.u32 16, %s1808
      %p1810 = scmp.lt.s32.totalorder %s1809, 15
      %s1811 = scalar_select %p1810, %s1809, 15
      %s1812 = smul.addr %s1811, 8
      %s1813 = scalar_lea.vmem %s2, %s1812
    $region29: #{tpu_custom_call.1} parent=1 // pred_fallthru
      _
    %1814 = vsyncpa [#allocation3], 1
    %1815 = vsyncpa [#allocation5], 1

</llo_original>
